<compile_context>
chip_gen: v7x
topology: tpu7x:2x2x1
jax: 0.10.0
libtpu: 0.0.40
codegen_flags: <defaults>
</compile_context>

<pallas_src>
from functools import partial

import numpy as np
import jax
import jax.numpy as jnp
from jax.experimental import pallas as pl
from jax.experimental.pallas import tpu as pltpu


# ---------------------------------------------------------------------------
# Kernel
# ---------------------------------------------------------------------------
def hlc_kernel(x_ref, wc_ref, bc_ref, w1_ref, b1_ref, w2_ref, b2_ref,
               whv_ref, bhv_ref, eps_ref,
               z_ref, mean_ref, logvar_ref):
    x = x_ref[...]                                                   # (tb, 180)

    # conv-as-matmul (block-diagonal, padded to 256 lanes) + bias + ReLU
    feat = jnp.maximum(
        jnp.dot(x, wc_ref[...], preferred_element_type=jnp.float32) + bc_ref[...],
        0.0)                                                         # (tb, 256)

    # linear1 (256 -> 128 padded) + ReLU
    h1 = jnp.maximum(
        jnp.dot(feat, w1_ref[...], preferred_element_type=jnp.float32) + b1_ref[...],
        0.0)                                                         # (tb, 128)

    # linear2 (128 -> 128 padded) + tanh
    h2 = jnp.tanh(
        jnp.dot(h1, w2_ref[...], preferred_element_type=jnp.float32) + b2_ref[...])

    # fused latent heads: mean in cols [0,400), logvar in [512,912)
    mv = jnp.dot(h2, whv_ref[...], preferred_element_type=jnp.float32) + bhv_ref[...]
    mean = mv[:, 0:400]
    logvar = mv[:, 512:912]

    # reparameterize: z = mean + eps * exp(0.5 * logvar)
    std = jnp.exp(0.5 * logvar)
    z_ref[...] = mean + eps_ref[...] * std
    mean_ref[...] = mean
    logvar_ref[...] = logvar


# ---------------------------------------------------------------------------
# One-time host-side parameter preparation (fold conv, permute, pad, fuse)
# ---------------------------------------------------------------------------
def prepare_params(params):
    conv_w = np.asarray(params["conv_w"], np.float32)       # (64, 60)
    conv_b = np.asarray(params["conv_b"], np.float32)       # (64,)
    w1 = np.asarray(params["w1"], np.float32)                # (100, 192)
    b1 = np.asarray(params["b1"], np.float32)
    w2 = np.asarray(params["w2"], np.float32)                # (100, 100)
    b2 = np.asarray(params["b2"], np.float32)
    wm = np.asarray(params["wm"], np.float32)                # (400, 100)
    bm = np.asarray(params["bm"], np.float32)
    wv = np.asarray(params["wv"], np.float32)                # (400, 100)
    bv = np.asarray(params["bv"], np.float32)

    # Conv2d(1,64,(1,60),stride=(1,60)) as block-diagonal matmul.  Output
    # columns are window-major j = w*64 + c; padded 192 -> 256 lanes.
    wc = np.zeros((180, 256), np.float32)
    for w in range(3):
        wc[w * 60:(w + 1) * 60, w * 64:(w + 1) * 64] = conv_w.T
    bc = np.zeros((1, 256), np.float32)
    bc[0, :192] = np.tile(conv_b, 3)

    # linear1: permute input columns (PyTorch NCHW flatten is i = c*3 + w,
    # our feature order is j = w*64 + c), pad K 192->256, N 100->128.
    j = np.arange(192)
    perm = (j % 64) * 3 + (j // 64)
    w1p = np.zeros((256, 128), np.float32)
    w1p[:192, :100] = w1.T[perm]
    b1p = np.zeros((1, 128), np.float32)
    b1p[0, :100] = b1

    # linear2: pad 100 -> 128 on both dims.
    w2p = np.zeros((128, 128), np.float32)
    w2p[:100, :100] = w2.T
    b2p = np.zeros((1, 128), np.float32)
    b2p[0, :100] = b2

    # fused latent heads (128, 1024): mean cols [0,400), logvar cols [512,912)
    # so each in-kernel slice starts on a 128-lane boundary.
    whv = np.zeros((128, 1024), np.float32)
    whv[:100, 0:400] = wm.T
    whv[:100, 512:912] = wv.T
    bhv = np.zeros((1, 1024), np.float32)
    bhv[0, 0:400] = bm
    bhv[0, 512:912] = bv

    prep = dict(wc=wc, bc=bc, w1=w1p, b1=b1p, w2=w2p, b2=b2p, whv=whv, bhv=bhv)
    return {k: jnp.asarray(v) for k, v in prep.items()}


def _round_up(x, m):
    return (x + m - 1) // m * m


# ---------------------------------------------------------------------------
# Forward wrapper
# ---------------------------------------------------------------------------
@partial(jax.jit, static_argnames=("tile_b",))
def hlc_forward(obs, prep, eps, *, tile_b=512):
    """obs: (B, D>=181) f32; eps: (B, 400) std normal; returns (z, mean, logvar)."""
    B = obs.shape[0]
    x = obs[:, 1:181].astype(jnp.float32)                            # (B, 180)

    # Batch tile: multiple of 8 sublanes, no larger than the (padded) batch.
    tb = min(_round_up(tile_b, 8), _round_up(B, 8))
    B_pad = _round_up(B, tb)
    if B_pad != B:
        x = jnp.pad(x, ((0, B_pad - B), (0, 0)))
        eps_p = jnp.pad(eps, ((0, B_pad - B), (0, 0)))
    else:
        eps_p = eps

    grid = (B_pad // tb,)

    def batch_spec(width):
        return pl.BlockSpec((tb, width), lambda i: (i, 0))

    def const_spec(shape):
        return pl.BlockSpec(shape, lambda i: (0, 0))

    in_specs = [
        batch_spec(180),                     # x
        const_spec((180, 256)),              # wc
        const_spec((1, 256)),                # bc
        const_spec((256, 128)),              # w1
        const_spec((1, 128)),                # b1
        const_spec((128, 128)),              # w2
        const_spec((1, 128)),                # b2
        const_spec((128, 1024)),             # whv (fused heads)
        const_spec((1, 1024)),               # bhv
        batch_spec(400),                     # eps
    ]
    out_specs = (batch_spec(400), batch_spec(400), batch_spec(400))

    z, mean, logvar = pl.pallas_call(
        hlc_kernel,
        grid=grid,
        in_specs=in_specs,
        out_specs=out_specs,
        out_shape=(
            jax.ShapeDtypeStruct((B_pad, 400), jnp.float32),
            jax.ShapeDtypeStruct((B_pad, 400), jnp.float32),
            jax.ShapeDtypeStruct((B_pad, 400), jnp.float32),
        ),
        compiler_params=pltpu.CompilerParams(
            dimension_semantics=("parallel",)),
    )(x, prep["wc"], prep["bc"], prep["w1"], prep["b1"],
      prep["w2"], prep["b2"], prep["whv"], prep["bhv"], eps_p)

    return z[:B], mean[:B], logvar[:B]


# ---------------------------------------------------------------------------
# Synthetic parameters + pure-JAX reference (mirrors the PyTorch forward)
# ---------------------------------------------------------------------------
def init_params(key):
    ks = jax.random.split(key, 10)
    p = {}
    p["conv_w"] = 0.05 * jax.random.normal(ks[0], (64, 60), jnp.float32)
    p["conv_b"] = 0.05 * jax.random.normal(ks[1], (64,), jnp.float32)
    p["w1"] = 0.05 * jax.random.normal(ks[2], (100, 192), jnp.float32)
    p["b1"] = jnp.zeros((100,), jnp.float32)
    p["w2"] = 0.05 * jax.random.normal(ks[3], (100, 100), jnp.float32)
    p["b2"] = jnp.zeros((100,), jnp.float32)
    p["wm"] = 0.05 * jax.random.normal(ks[4], (400, 100), jnp.float32)
    p["bm"] = 0.05 * jax.random.normal(ks[5], (400,), jnp.float32)
    p["wv"] = 0.05 * jax.random.normal(ks[6], (400, 100), jnp.float32)
    p["bv"] = 0.05 * jax.random.normal(ks[7], (400,), jnp.float32)
    return p


def hlc_reference(obs, params, eps):
    B = obs.shape[0]
    x = obs[:, 1:181].astype(jnp.float32)
    xw = x.reshape(B, 3, 60)
    conv = jnp.einsum("bwk,ck->bwc", xw, params["conv_w"]) + params["conv_b"]
    conv = jax.nn.relu(conv)                                          # (B, 3, 64)
    feat = jnp.transpose(conv, (0, 2, 1)).reshape(B, 192)             # NCHW flatten
    h1 = jax.nn.relu(feat @ params["w1"].T + params["b1"])
    h2 = jnp.tanh(h1 @ params["w2"].T + params["b2"])
    mean = h2 @ params["wm"].T + params["bm"]
    logvar = h2 @ params["wv"].T + params["bv"]
    z = mean + eps * jnp.exp(0.5 * logvar)
    return z, mean, logvar


if __name__ == "__main__":
    key = jax.random.PRNGKey(0)
    k_param, k_obs, k_eps = jax.random.split(key, 3)

    B, D = 64, 185                          # obs needs >= 181 columns
    params = init_params(k_param)
    prep = prepare_params(params)           # one-time host-side weight prep
    obs = jax.random.normal(k_obs, (B, D), jnp.float32)
    # TODO(synk): eps could instead be generated in-kernel via pltpu.prng_seed /
    # pltpu.stateful_normal to cut HBM traffic; kept as an explicit input so the
    # reparameterization matches the reference bit-for-bit.
    eps = jax.random.normal(k_eps, (B, 400), jnp.float32)

    # Small tile so the test exercises the batch grid (4 steps); production
    # batches should use the default tile_b=512.
    z, mean, logvar = jax.block_until_ready(
        hlc_forward(obs, prep, eps, tile_b=16))

    z_ref, mean_ref, logvar_ref = hlc_reference(obs, params, eps)
    np.testing.assert_allclose(np.asarray(mean), np.asarray(mean_ref), rtol=1e-5, atol=1e-5)
    np.testing.assert_allclose(np.asarray(logvar), np.asarray(logvar_ref), rtol=1e-5, atol=1e-5)
    np.testing.assert_allclose(np.asarray(z), np.asarray(z_ref), rtol=1e-5, atol=1e-5)

    print("KERNEL_OK")
</pallas_src>

<mosaic_0001>
module attributes {stable_mosaic.version = 11 : i64} {
  func.func @hlc_kernel(%arg0: i32, %arg1: memref<16x180xf32, #tpu.memory_space<vmem>>, %arg2: memref<180x256xf32, #tpu.memory_space<vmem>>, %arg3: memref<1x256xf32, #tpu.memory_space<vmem>>, %arg4: memref<256x128xf32, #tpu.memory_space<vmem>>, %arg5: memref<1x128xf32, #tpu.memory_space<vmem>>, %arg6: memref<128x128xf32, #tpu.memory_space<vmem>>, %arg7: memref<1x128xf32, #tpu.memory_space<vmem>>, %arg8: memref<128x1024xf32, #tpu.memory_space<vmem>>, %arg9: memref<1x1024xf32, #tpu.memory_space<vmem>>, %arg10: memref<16x400xf32, #tpu.memory_space<vmem>>, %arg11: memref<16x400xf32, #tpu.memory_space<vmem>>, %arg12: memref<16x400xf32, #tpu.memory_space<vmem>>, %arg13: memref<16x400xf32, #tpu.memory_space<vmem>>) attributes {dimension_semantics = [#tpu.dimension_semantics<parallel>], iteration_bounds = array<i64: 4>, scalar_prefetch = 0 : i64, scratch_operands = 0 : i64, tpu.core_type = #tpu.core_type<tc>, window_params = [{transform_indices = @transform_0, window_bounds = array<i64: 16, 180>}, {pipeline_mode = #tpu.pipeline_mode<synchronous>, transform_indices = @transform_1, window_bounds = array<i64: 180, 256>}, {pipeline_mode = #tpu.pipeline_mode<synchronous>, transform_indices = @transform_2, window_bounds = array<i64: 1, 256>}, {pipeline_mode = #tpu.pipeline_mode<synchronous>, transform_indices = @transform_3, window_bounds = array<i64: 256, 128>}, {pipeline_mode = #tpu.pipeline_mode<synchronous>, transform_indices = @transform_4, window_bounds = array<i64: 1, 128>}, {pipeline_mode = #tpu.pipeline_mode<synchronous>, transform_indices = @transform_5, window_bounds = array<i64: 128, 128>}, {pipeline_mode = #tpu.pipeline_mode<synchronous>, transform_indices = @transform_6, window_bounds = array<i64: 1, 128>}, {pipeline_mode = #tpu.pipeline_mode<synchronous>, transform_indices = @transform_7, window_bounds = array<i64: 128, 1024>}, {pipeline_mode = #tpu.pipeline_mode<synchronous>, transform_indices = @transform_8, window_bounds = array<i64: 1, 1024>}, {transform_indices = @transform_9, window_bounds = array<i64: 16, 400>}, {transform_indices = @transform_10, window_bounds = array<i64: 16, 400>}, {transform_indices = @transform_11, window_bounds = array<i64: 16, 400>}, {transform_indices = @transform_12, window_bounds = array<i64: 16, 400>}]} {
    %c0 = arith.constant 0 : index
    %c0_0 = arith.constant 0 : index
    %0 = vector.load %arg1[%c0, %c0_0] : memref<16x180xf32, #tpu.memory_space<vmem>>, vector<16x180xf32>
    %c0_1 = arith.constant 0 : index
    %c0_2 = arith.constant 0 : index
    %1 = vector.load %arg2[%c0_1, %c0_2] : memref<180x256xf32, #tpu.memory_space<vmem>>, vector<180x256xf32>
    %cst = arith.constant dense<0.000000e+00> : vector<16x256xf32>
    %2 = tpu.matmul %0, %1, %cst {dimension_numbers = #tpu.dot_dimension_numbers<[1], [0], [0], [1], [0, 0, 1, 1], [], []>} : vector<16x180xf32>, vector<180x256xf32>, vector<16x256xf32> -> vector<16x256xf32>
    %c0_3 = arith.constant 0 : index
    %c0_4 = arith.constant 0 : index
    %3 = vector.load %arg3[%c0_3, %c0_4] : memref<1x256xf32, #tpu.memory_space<vmem>>, vector<1x256xf32>
    %4 = vector.broadcast %3 : vector<1x256xf32> to vector<16x256xf32>
    %5 = arith.addf %2, %4 : vector<16x256xf32>
    %cst_5 = arith.constant 0.000000e+00 : f32
    %6 = vector.broadcast %cst_5 : f32 to vector<16x256xf32>
    %7 = arith.maximumf %5, %6 : vector<16x256xf32>
    %c0_6 = arith.constant 0 : index
    %c0_7 = arith.constant 0 : index
    %8 = vector.load %arg4[%c0_6, %c0_7] : memref<256x128xf32, #tpu.memory_space<vmem>>, vector<256x128xf32>
    %cst_8 = arith.constant dense<0.000000e+00> : vector<16x128xf32>
    %9 = tpu.matmul %7, %8, %cst_8 {dimension_numbers = #tpu.dot_dimension_numbers<[1], [0], [0], [1], [0, 0, 1, 1], [], []>} : vector<16x256xf32>, vector<256x128xf32>, vector<16x128xf32> -> vector<16x128xf32>
    %c0_9 = arith.constant 0 : index
    %c0_10 = arith.constant 0 : index
    %10 = vector.load %arg5[%c0_9, %c0_10] : memref<1x128xf32, #tpu.memory_space<vmem>>, vector<1x128xf32>
    %11 = vector.broadcast %10 : vector<1x128xf32> to vector<16x128xf32>
    %12 = arith.addf %9, %11 : vector<16x128xf32>
    %cst_11 = arith.constant 0.000000e+00 : f32
    %13 = vector.broadcast %cst_11 : f32 to vector<16x128xf32>
    %14 = arith.maximumf %12, %13 : vector<16x128xf32>
    %c0_12 = arith.constant 0 : index
    %c0_13 = arith.constant 0 : index
    %15 = vector.load %arg6[%c0_12, %c0_13] : memref<128x128xf32, #tpu.memory_space<vmem>>, vector<128x128xf32>
    %cst_14 = arith.constant dense<0.000000e+00> : vector<16x128xf32>
    %16 = tpu.matmul %14, %15, %cst_14 {dimension_numbers = #tpu.dot_dimension_numbers<[1], [0], [0], [1], [0, 0, 1, 1], [], []>} : vector<16x128xf32>, vector<128x128xf32>, vector<16x128xf32> -> vector<16x128xf32>
    %c0_15 = arith.constant 0 : index
    %c0_16 = arith.constant 0 : index
    %17 = vector.load %arg7[%c0_15, %c0_16] : memref<1x128xf32, #tpu.memory_space<vmem>>, vector<1x128xf32>
    %18 = vector.broadcast %17 : vector<1x128xf32> to vector<16x128xf32>
    %19 = arith.addf %16, %18 : vector<16x128xf32>
    %20 = math.tanh %19 : vector<16x128xf32>
    %c0_17 = arith.constant 0 : index
    %c0_18 = arith.constant 0 : index
    %21 = vector.load %arg8[%c0_17, %c0_18] : memref<128x1024xf32, #tpu.memory_space<vmem>>, vector<128x1024xf32>
    %cst_19 = arith.constant dense<0.000000e+00> : vector<16x1024xf32>
    %22 = tpu.matmul %20, %21, %cst_19 {dimension_numbers = #tpu.dot_dimension_numbers<[1], [0], [0], [1], [0, 0, 1, 1], [], []>} : vector<16x128xf32>, vector<128x1024xf32>, vector<16x1024xf32> -> vector<16x1024xf32>
    %c0_20 = arith.constant 0 : index
    %c0_21 = arith.constant 0 : index
    %23 = vector.load %arg9[%c0_20, %c0_21] : memref<1x1024xf32, #tpu.memory_space<vmem>>, vector<1x1024xf32>
    %24 = vector.broadcast %23 : vector<1x1024xf32> to vector<16x1024xf32>
    %25 = arith.addf %22, %24 : vector<16x1024xf32>
    %26 = vector.extract_strided_slice %25 {offsets = [0, 0], sizes = [16, 400], strides = [1, 1]} : vector<16x1024xf32> to vector<16x400xf32>
    %27 = vector.extract_strided_slice %25 {offsets = [0, 512], sizes = [16, 400], strides = [1, 1]} : vector<16x1024xf32> to vector<16x400xf32>
    %cst_22 = arith.constant 5.000000e-01 : f32
    %28 = vector.broadcast %cst_22 : f32 to vector<16x400xf32>
    %29 = arith.mulf %28, %27 : vector<16x400xf32>
    %30 = math.exp %29 : vector<16x400xf32>
    %c0_23 = arith.constant 0 : index
    %c0_24 = arith.constant 0 : index
    %31 = vector.load %arg10[%c0_23, %c0_24] : memref<16x400xf32, #tpu.memory_space<vmem>>, vector<16x400xf32>
    %32 = arith.mulf %31, %30 : vector<16x400xf32>
    %33 = arith.addf %26, %32 : vector<16x400xf32>
    %c0_25 = arith.constant 0 : index
    %c0_26 = arith.constant 0 : index
    %34 = vector.load %arg11[%c0_25, %c0_26] : memref<16x400xf32, #tpu.memory_space<vmem>>, vector<16x400xf32>
    tpu.vector_store %arg11[%c0_25, %c0_26], %33 {strides = array<i32>} : memref<16x400xf32, #tpu.memory_space<vmem>>, vector<16x400xf32>,
    %c0_27 = arith.constant 0 : index
    %c0_28 = arith.constant 0 : index
    %35 = vector.load %arg12[%c0_27, %c0_28] : memref<16x400xf32, #tpu.memory_space<vmem>>, vector<16x400xf32>
    tpu.vector_store %arg12[%c0_27, %c0_28], %26 {strides = array<i32>} : memref<16x400xf32, #tpu.memory_space<vmem>>, vector<16x400xf32>,
    %c0_29 = arith.constant 0 : index
    %c0_30 = arith.constant 0 : index
    %36 = vector.load %arg13[%c0_29, %c0_30] : memref<16x400xf32, #tpu.memory_space<vmem>>, vector<16x400xf32>
    tpu.vector_store %arg13[%c0_29, %c0_30], %27 {strides = array<i32>} : memref<16x400xf32, #tpu.memory_space<vmem>>, vector<16x400xf32>,
    return
  }
  func.func @transform_0(%arg0: i32) -> (i32, i32) {
    %c0_i32 = arith.constant 0 : i32
    %c0_i32_0 = arith.constant 0 : i32
    return %arg0, %c0_i32 : i32, i32
  }
  func.func @transform_1(%arg0: i32) -> (i32, i32) {
    %c0_i32 = arith.constant 0 : i32
    %c0_i32_0 = arith.constant 0 : i32
    %c0_i32_1 = arith.constant 0 : i32
    return %c0_i32, %c0_i32_0 : i32, i32
  }
  func.func @transform_2(%arg0: i32) -> (i32, i32) {
    %c0_i32 = arith.constant 0 : i32
    %c0_i32_0 = arith.constant 0 : i32
    %c0_i32_1 = arith.constant 0 : i32
    return %c0_i32, %c0_i32_0 : i32, i32
  }
  func.func @transform_3(%arg0: i32) -> (i32, i32) {
    %c0_i32 = arith.constant 0 : i32
    %c0_i32_0 = arith.constant 0 : i32
    %c0_i32_1 = arith.constant 0 : i32
    return %c0_i32, %c0_i32_0 : i32, i32
  }
  func.func @transform_4(%arg0: i32) -> (i32, i32) {
    %c0_i32 = arith.constant 0 : i32
    %c0_i32_0 = arith.constant 0 : i32
    %c0_i32_1 = arith.constant 0 : i32
    return %c0_i32, %c0_i32_0 : i32, i32
  }
  func.func @transform_5(%arg0: i32) -> (i32, i32) {
    %c0_i32 = arith.constant 0 : i32
    %c0_i32_0 = arith.constant 0 : i32
    %c0_i32_1 = arith.constant 0 : i32
    return %c0_i32, %c0_i32_0 : i32, i32
  }
  func.func @transform_6(%arg0: i32) -> (i32, i32) {
    %c0_i32 = arith.constant 0 : i32
    %c0_i32_0 = arith.constant 0 : i32
    %c0_i32_1 = arith.constant 0 : i32
    return %c0_i32, %c0_i32_0 : i32, i32
  }
  func.func @transform_7(%arg0: i32) -> (i32, i32) {
    %c0_i32 = arith.constant 0 : i32
    %c0_i32_0 = arith.constant 0 : i32
    %c0_i32_1 = arith.constant 0 : i32
    return %c0_i32, %c0_i32_0 : i32, i32
  }
  func.func @transform_8(%arg0: i32) -> (i32, i32) {
    %c0_i32 = arith.constant 0 : i32
    %c0_i32_0 = arith.constant 0 : i32
    %c0_i32_1 = arith.constant 0 : i32
    return %c0_i32, %c0_i32_0 : i32, i32
  }
  func.func @transform_9(%arg0: i32) -> (i32, i32) {
    %c0_i32 = arith.constant 0 : i32
    %c0_i32_0 = arith.constant 0 : i32
    return %arg0, %c0_i32 : i32, i32
  }
  func.func @transform_10(%arg0: i32) -> (i32, i32) {
    %c0_i32 = arith.constant 0 : i32
    %c0_i32_0 = arith.constant 0 : i32
    return %arg0, %c0_i32 : i32, i32
  }
  func.func @transform_11(%arg0: i32) -> (i32, i32) {
    %c0_i32 = arith.constant 0 : i32
    %c0_i32_0 = arith.constant 0 : i32
    return %arg0, %c0_i32 : i32, i32
  }
  func.func @transform_12(%arg0: i32) -> (i32, i32) {
    %c0_i32 = arith.constant 0 : i32
    %c0_i32_0 = arith.constant 0 : i32
    return %arg0, %c0_i32 : i32, i32
  }
}

</mosaic_0001>

<llo_original>
// kernel: hlc_forward.1
$region0: #{hlc_forward.1}
  #allocation0 [shape = 'u32[]', space=smem, size = 0x4, offset = 0x4, fixed_abs, tag = 'smem constant byte address 0x4 - core index']
  #allocation1 [shape = 'u32[144,128]{1,0:T(1,128)}', space=vmem, size = 0x12000, scoped, tag = 'internal scratch']
  %s0 = inlined_call_operand.vmem [shape: f32[64,180], index: 0, kind: input, shape index: {}]
  %s1 = inlined_call_operand.hbm [shape: f32[180,256], index: 1, kind: input, shape index: {}]
  %s2 = inlined_call_operand.vmem [shape: f32[1,256], index: 2, kind: input, shape index: {}]
  %s3 = inlined_call_operand.vmem [shape: f32[256,128], index: 3, kind: input, shape index: {}]
  %s4 = inlined_call_operand.vmem [shape: f32[1,128], index: 4, kind: input, shape index: {}]
  %s5 = inlined_call_operand.hbm [shape: f32[128,128], index: 5, kind: input, shape index: {}]
  %s6 = inlined_call_operand.vmem [shape: f32[1,128], index: 6, kind: input, shape index: {}]
  %s7 = inlined_call_operand.hbm [shape: f32[128,1024], index: 7, kind: input, shape index: {}]
  %s8 = inlined_call_operand.vmem [shape: f32[1,1024], index: 8, kind: input, shape index: {}]
  %s9 = inlined_call_operand.hbm [shape: f32[64,400], index: 9, kind: input, shape index: {}]
  %s10 = inlined_call_operand.hbm [shape: f32[64,400], index: 10, kind: output, shape index: {0}]
  %s11 = inlined_call_operand.hbm [shape: f32[64,400], index: 11, kind: output, shape index: {1}]
  %s12 = inlined_call_operand.hbm [shape: f32[64,400], index: 12, kind: output, shape index: {2}]
  %13 = xla_tuple %s10, %s11, %s12
  %s14 = sld [smem:[#allocation0]]
  $region105: #{hlc_forward.1} parent=0
    _
  %s16 = ssub.s32 1, %s14
  %s17 = scalar_select 0, %s16, %s14
  $region1: #{hlc_forward.1} parent=0
    #allocation2 [shape = 'u8[188416]{0}', space=vmem, size = 0x2e000, scoped, tag = 'input window, operand 1, single buffered']
    #allocation3 [shape = 's32[2]{0}', space=sflag, size = 0x8, scoped, tag = 'scoped memory for hlc_forward.1']
    #allocation4 [shape = 's32[2]{0}', space=sflag, size = 0x8, scoped, tag = 'scoped memory for hlc_forward.1']
    #allocation5 [shape = 'u8[65536]{0}', space=vmem, size = 0x10000, scoped, tag = 'input window, operand 5, single buffered']
    #allocation6 [shape = 's32[1]{0}', space=sflag, size = 0x4, scoped, tag = 'scoped memory for hlc_forward.1']
    #allocation7 [shape = 'u8[524288]{0}', space=vmem, size = 0x80000, scoped, tag = 'input window, operand 7, single buffered']
    #allocation8 [shape = 'u8[65536]{0}', space=vmem, size = 0x10000, scoped, tag = 'input window, operand 9']
    #allocation9 [shape = 's32[2]{0}', space=sflag, size = 0x8, scoped, tag = 'scoped memory for hlc_forward.1']
    #allocation10 [shape = 'u8[65536]{0}', space=vmem, size = 0x10000, scoped, tag = 'output window, operand 0']
    #allocation11 [shape = 'u8[65536]{0}', space=vmem, size = 0x10000, scoped, tag = 'output window, operand 1']
    #allocation12 [shape = 's32[2]{0}', space=sflag, size = 0x8, scoped, tag = 'scoped memory for hlc_forward.1']
    #allocation13 [shape = 'u8[65536]{0}', space=vmem, size = 0x10000, scoped, tag = 'output window, operand 2']
    %18 = vsyncpa [#allocation3], 0
    %19 = vsyncpa [#allocation6], 0
    %20 = vsyncpa [#allocation9], 0
    %s21 = scalar_lea.sflag [#allocation9], 1
    %22 = vsyncpa %s21, 0
    %23 = vsyncpa [#allocation4], 0
    %s24 = scalar_lea.sflag [#allocation4], 1
    %25 = vsyncpa %s24, 0
    %26 = vsyncpa [#allocation12], 0
    %s27 = scalar_lea.sflag [#allocation12], 1
    %28 = vsyncpa %s27, 0
    loop: start=0, step=1, limit=6
    $region2: #{hlc_forward.1} parent=1 // loop_pre_header
      _
    $region3: #{hlc_forward.1} parent=1 // loop_header
      %s30 = sphi 0, %s34
      %p31 = scmp.ge.s32.totalorder %s30, 6
      %s40 = sphi 0, %s42
      %s43 = sphi 0, %s40
      %s44 = sphi 0, %s43
      %s60 = sphi 0, %s44
      %s64 = sphi 0, %s64
      %s66 = sphi 0, %s64
      %s67 = sphi 0, %s66
      %s81 = sphi 0, %s67
      %s85 = sphi 0, %s85
      %s87 = sphi 0, %s85
      %s88 = sphi 0, %s87
      %s102 = sphi 0, %s88
      %s106 = sphi 0, %s106
      %s108 = sphi 0, %s106
      %s109 = sphi 0, %s108
      %s123 = sphi 0, %s109
      %s127 = sphi 0, %s127
      %s129 = sphi 0, %s127
      %s130 = sphi 0, %s129
      %s144 = sphi 0, %s130
      %s148 = sphi 0, %s148
      %s150 = sphi 0, %s148
      %s151 = sphi 0, %s150
      %s165 = sphi 0, %s151
      %s169 = sphi 0, %s169
      %s171 = sphi 0, %s169
      %s172 = sphi 0, %s171
      %s186 = sphi 0, %s172
      %s190 = sphi 0, %s190
      %s192 = sphi 0, %s190
      %s193 = sphi 0, %s192
      %s207 = sphi 0, %s193
      %s211 = sphi 0, %s211
      %s213 = sphi 0, %s211
      %s214 = sphi 0, %s213
      %s228 = sphi 0, %s214
      %s234 = sphi 0, %s236
      %s237 = sphi 0, %s234
      %s238 = sphi 0, %s237
      %s254 = sphi 0, %s238
      %s260 = sphi 0, %s262
      %s263 = sphi 0, %s260
      %s264 = sphi 0, %s263
      %s280 = sphi 0, %s264
      %s286 = sphi 0, %s288
      %s289 = sphi 0, %s286
      %s290 = sphi 0, %s289
      %s306 = sphi 0, %s290
      %s312 = sphi 0, %s314
      %s315 = sphi 0, %s312
      %s316 = sphi 0, %s315
      %s332 = sphi 0, %s316
    $region4: #{hlc_forward.1} parent=1 // loop_header_branch
      %33 = sbr.rel (%p31) target = $region8
    $region5: #{hlc_forward.1} parent=1 // loop_body
      %s35 = ssub.s32 %s30, 1
      %s36 = ssub.s32 %s30, 2
      %s37 = sadd.s32 %s30, 1
      %s38 = ssub.s32 %s30, %s37
      %p39 = scmp.eq.s32.totalorder %s38, 0
      %s41 = sadd.s32 %s40, 1
      %s42 = scalar_select %p39, %s40, %s41
      %p45 = pneg %p39
      %p46 = scmp.eq.s32.totalorder %s30, 3
      %p47 = por %p45, %p46
      %p48 = scmp.ne.s32.totalorder %s40, %s43
      %p49 = scmp.eq.s32.totalorder %s30, 0
      %p50 = por %p48, %p49
      %p51 = scmp.ne.s32.totalorder %s40, %s43
      %p52 = scmp.eq.s32.totalorder %s35, 3
      %p53 = por %p51, %p52
      %p54 = scmp.ne.s32.totalorder %s43, %s44
      %p55 = scmp.eq.s32.totalorder %s35, 0
      %p56 = por %p54, %p55
      %p57 = scmp.ne.s32.totalorder %s43, %s44
      %p58 = scmp.eq.s32.totalorder %s36, 3
      %p59 = por %p57, %p58
      %p61 = scmp.ne.s32.totalorder %s44, %s60
      %p62 = scmp.eq.s32.totalorder %s36, 0
      %p63 = por %p61, %p62
      %s65 = sadd.s32 %s64, 1
      %p68 = scmp.eq.s32.totalorder %s30, 3
      %p69 = scmp.ne.s32.totalorder %s64, %s66
      %p70 = scmp.eq.s32.totalorder %s30, 0
      %p71 = por %p69, %p70
      %p72 = scmp.ne.s32.totalorder %s64, %s66
      %p73 = scmp.eq.s32.totalorder %s35, 3
      %p74 = por %p72, %p73
      %p75 = scmp.ne.s32.totalorder %s66, %s67
      %p76 = scmp.eq.s32.totalorder %s35, 0
      %p77 = por %p75, %p76
      %p78 = scmp.ne.s32.totalorder %s66, %s67
      %p79 = scmp.eq.s32.totalorder %s36, 3
      %p80 = por %p78, %p79
      %p82 = scmp.ne.s32.totalorder %s67, %s81
      %p83 = scmp.eq.s32.totalorder %s36, 0
      %p84 = por %p82, %p83
      %s86 = sadd.s32 %s85, 1
      %p89 = scmp.eq.s32.totalorder %s30, 3
      %p90 = scmp.ne.s32.totalorder %s85, %s87
      %p91 = scmp.eq.s32.totalorder %s30, 0
      %p92 = por %p90, %p91
      %p93 = scmp.ne.s32.totalorder %s85, %s87
      %p94 = scmp.eq.s32.totalorder %s35, 3
      %p95 = por %p93, %p94
      %p96 = scmp.ne.s32.totalorder %s87, %s88
      %p97 = scmp.eq.s32.totalorder %s35, 0
      %p98 = por %p96, %p97
      %p99 = scmp.ne.s32.totalorder %s87, %s88
      %p100 = scmp.eq.s32.totalorder %s36, 3
      %p101 = por %p99, %p100
      %p103 = scmp.ne.s32.totalorder %s88, %s102
      %p104 = scmp.eq.s32.totalorder %s36, 0
      %p105 = por %p103, %p104
      %s107 = sadd.s32 %s106, 1
      %p110 = scmp.eq.s32.totalorder %s30, 3
      %p111 = scmp.ne.s32.totalorder %s106, %s108
      %p112 = scmp.eq.s32.totalorder %s30, 0
      %p113 = por %p111, %p112
      %p114 = scmp.ne.s32.totalorder %s106, %s108
      %p115 = scmp.eq.s32.totalorder %s35, 3
      %p116 = por %p114, %p115
      %p117 = scmp.ne.s32.totalorder %s108, %s109
      %p118 = scmp.eq.s32.totalorder %s35, 0
      %p119 = por %p117, %p118
      %p120 = scmp.ne.s32.totalorder %s108, %s109
      %p121 = scmp.eq.s32.totalorder %s36, 3
      %p122 = por %p120, %p121
      %p124 = scmp.ne.s32.totalorder %s109, %s123
      %p125 = scmp.eq.s32.totalorder %s36, 0
      %p126 = por %p124, %p125
      %s128 = sadd.s32 %s127, 1
      %p131 = scmp.eq.s32.totalorder %s30, 3
      %p132 = scmp.ne.s32.totalorder %s127, %s129
      %p133 = scmp.eq.s32.totalorder %s30, 0
      %p134 = por %p132, %p133
      %p135 = scmp.ne.s32.totalorder %s127, %s129
      %p136 = scmp.eq.s32.totalorder %s35, 3
      %p137 = por %p135, %p136
      %p138 = scmp.ne.s32.totalorder %s129, %s130
      %p139 = scmp.eq.s32.totalorder %s35, 0
      %p140 = por %p138, %p139
      %p141 = scmp.ne.s32.totalorder %s129, %s130
      %p142 = scmp.eq.s32.totalorder %s36, 3
      %p143 = por %p141, %p142
      %p145 = scmp.ne.s32.totalorder %s130, %s144
      %p146 = scmp.eq.s32.totalorder %s36, 0
      %p147 = por %p145, %p146
      %s149 = sadd.s32 %s148, 1
      %p152 = scmp.eq.s32.totalorder %s30, 3
      %p153 = scmp.ne.s32.totalorder %s148, %s150
      %p154 = scmp.eq.s32.totalorder %s30, 0
      %p155 = por %p153, %p154
      %p156 = scmp.ne.s32.totalorder %s148, %s150
      %p157 = scmp.eq.s32.totalorder %s35, 3
      %p158 = por %p156, %p157
      %p159 = scmp.ne.s32.totalorder %s150, %s151
      %p160 = scmp.eq.s32.totalorder %s35, 0
      %p161 = por %p159, %p160
      %p162 = scmp.ne.s32.totalorder %s150, %s151
      %p163 = scmp.eq.s32.totalorder %s36, 3
      %p164 = por %p162, %p163
      %p166 = scmp.ne.s32.totalorder %s151, %s165
      %p167 = scmp.eq.s32.totalorder %s36, 0
      %p168 = por %p166, %p167
      %s170 = sadd.s32 %s169, 1
      %p173 = scmp.eq.s32.totalorder %s30, 3
      %p174 = scmp.ne.s32.totalorder %s169, %s171
      %p175 = scmp.eq.s32.totalorder %s30, 0
      %p176 = por %p174, %p175
      %p177 = scmp.ne.s32.totalorder %s169, %s171
      %p178 = scmp.eq.s32.totalorder %s35, 3
      %p179 = por %p177, %p178
      %p180 = scmp.ne.s32.totalorder %s171, %s172
      %p181 = scmp.eq.s32.totalorder %s35, 0
      %p182 = por %p180, %p181
      %p183 = scmp.ne.s32.totalorder %s171, %s172
      %p184 = scmp.eq.s32.totalorder %s36, 3
      %p185 = por %p183, %p184
      %p187 = scmp.ne.s32.totalorder %s172, %s186
      %p188 = scmp.eq.s32.totalorder %s36, 0
      %p189 = por %p187, %p188
      %s191 = sadd.s32 %s190, 1
      %p194 = scmp.eq.s32.totalorder %s30, 3
      %p195 = scmp.ne.s32.totalorder %s190, %s192
      %p196 = scmp.eq.s32.totalorder %s30, 0
      %p197 = por %p195, %p196
      %p198 = scmp.ne.s32.totalorder %s190, %s192
      %p199 = scmp.eq.s32.totalorder %s35, 3
      %p200 = por %p198, %p199
      %p201 = scmp.ne.s32.totalorder %s192, %s193
      %p202 = scmp.eq.s32.totalorder %s35, 0
      %p203 = por %p201, %p202
      %p204 = scmp.ne.s32.totalorder %s192, %s193
      %p205 = scmp.eq.s32.totalorder %s36, 3
      %p206 = por %p204, %p205
      %p208 = scmp.ne.s32.totalorder %s193, %s207
      %p209 = scmp.eq.s32.totalorder %s36, 0
      %p210 = por %p208, %p209
      %s212 = sadd.s32 %s211, 1
      %p215 = scmp.eq.s32.totalorder %s30, 3
      %p216 = scmp.ne.s32.totalorder %s211, %s213
      %p217 = scmp.eq.s32.totalorder %s30, 0
      %p218 = por %p216, %p217
      %p219 = scmp.ne.s32.totalorder %s211, %s213
      %p220 = scmp.eq.s32.totalorder %s35, 3
      %p221 = por %p219, %p220
      %p222 = scmp.ne.s32.totalorder %s213, %s214
      %p223 = scmp.eq.s32.totalorder %s35, 0
      %p224 = por %p222, %p223
      %p225 = scmp.ne.s32.totalorder %s213, %s214
      %p226 = scmp.eq.s32.totalorder %s36, 3
      %p227 = por %p225, %p226
      %p229 = scmp.ne.s32.totalorder %s214, %s228
      %p230 = scmp.eq.s32.totalorder %s36, 0
      %p231 = por %p229, %p230
      %s232 = ssub.s32 %s30, %s37
      %p233 = scmp.eq.s32.totalorder %s232, 0
      %s235 = sadd.s32 %s234, 1
      %s236 = scalar_select %p233, %s234, %s235
      %p239 = pneg %p233
      %p240 = scmp.eq.s32.totalorder %s30, 3
      %p241 = por %p239, %p240
      %p242 = scmp.ne.s32.totalorder %s234, %s237
      %p243 = scmp.eq.s32.totalorder %s30, 0
      %p244 = por %p242, %p243
      %p245 = scmp.ne.s32.totalorder %s234, %s237
      %p246 = scmp.eq.s32.totalorder %s35, 3
      %p247 = por %p245, %p246
      %p248 = scmp.ne.s32.totalorder %s237, %s238
      %p249 = scmp.eq.s32.totalorder %s35, 0
      %p250 = por %p248, %p249
      %p251 = scmp.ne.s32.totalorder %s237, %s238
      %p252 = scmp.eq.s32.totalorder %s36, 3
      %p253 = por %p251, %p252
      %p255 = scmp.ne.s32.totalorder %s238, %s254
      %p256 = scmp.eq.s32.totalorder %s36, 0
      %p257 = por %p255, %p256
      %s258 = ssub.s32 %s30, %s37
      %p259 = scmp.eq.s32.totalorder %s258, 0
      %s261 = sadd.s32 %s260, 1
      %s262 = scalar_select %p259, %s260, %s261
      %p265 = pneg %p259
      %p266 = scmp.eq.s32.totalorder %s30, 3
      %p267 = por %p265, %p266
      %p268 = scmp.ne.s32.totalorder %s260, %s263
      %p269 = scmp.eq.s32.totalorder %s30, 0
      %p270 = por %p268, %p269
      %p271 = scmp.ne.s32.totalorder %s260, %s263
      %p272 = scmp.eq.s32.totalorder %s35, 3
      %p273 = por %p271, %p272
      %p274 = scmp.ne.s32.totalorder %s263, %s264
      %p275 = scmp.eq.s32.totalorder %s35, 0
      %p276 = por %p274, %p275
      %p277 = scmp.ne.s32.totalorder %s263, %s264
      %p278 = scmp.eq.s32.totalorder %s36, 3
      %p279 = por %p277, %p278
      %p281 = scmp.ne.s32.totalorder %s264, %s280
      %p282 = scmp.eq.s32.totalorder %s36, 0
      %p283 = por %p281, %p282
      %s284 = ssub.s32 %s30, %s37
      %p285 = scmp.eq.s32.totalorder %s284, 0
      %s287 = sadd.s32 %s286, 1
      %s288 = scalar_select %p285, %s286, %s287
      %p291 = pneg %p285
      %p292 = scmp.eq.s32.totalorder %s30, 3
      %p293 = por %p291, %p292
      %p294 = scmp.ne.s32.totalorder %s286, %s289
      %p295 = scmp.eq.s32.totalorder %s30, 0
      %p296 = por %p294, %p295
      %p297 = scmp.ne.s32.totalorder %s286, %s289
      %p298 = scmp.eq.s32.totalorder %s35, 3
      %p299 = por %p297, %p298
      %p300 = scmp.ne.s32.totalorder %s289, %s290
      %p301 = scmp.eq.s32.totalorder %s35, 0
      %p302 = por %p300, %p301
      %p303 = scmp.ne.s32.totalorder %s289, %s290
      %p304 = scmp.eq.s32.totalorder %s36, 3
      %p305 = por %p303, %p304
      %p307 = scmp.ne.s32.totalorder %s290, %s306
      %p308 = scmp.eq.s32.totalorder %s36, 0
      %p309 = por %p307, %p308
      %s310 = ssub.s32 %s30, %s37
      %p311 = scmp.eq.s32.totalorder %s310, 0
      %s313 = sadd.s32 %s312, 1
      %s314 = scalar_select %p311, %s312, %s313
      %p317 = pneg %p311
      %p318 = scmp.eq.s32.totalorder %s30, 3
      %p319 = por %p317, %p318
      %p320 = scmp.ne.s32.totalorder %s312, %s315
      %p321 = scmp.eq.s32.totalorder %s30, 0
      %p322 = por %p320, %p321
      %p323 = scmp.ne.s32.totalorder %s312, %s315
      %p324 = scmp.eq.s32.totalorder %s35, 3
      %p325 = por %p323, %p324
      %p326 = scmp.ne.s32.totalorder %s315, %s316
      %p327 = scmp.eq.s32.totalorder %s35, 0
      %p328 = por %p326, %p327
      %p329 = scmp.ne.s32.totalorder %s315, %s316
      %p330 = scmp.eq.s32.totalorder %s36, 3
      %p331 = por %p329, %p330
      %p333 = scmp.ne.s32.totalorder %s316, %s332
      %p334 = scmp.eq.s32.totalorder %s36, 0
      %p335 = por %p333, %p334
      %p336 = scmp.le.s32.totalorder 1, %s30
      %p337 = scmp.lt.s32.totalorder %s30, 5
      %p338 = pnand %p336, %p337
      %p339 = pneg %p338
      // Predicated region
      $region9: #{hlc_forward.1} parent=5 // pred_check
        _
      $region10: #{hlc_forward.1} parent=5 // pred_check_branch
        %341 = sbr.rel (%p338) target = $region12
      $region11: #{hlc_forward.1} parent=5 // pred_region
        %s342 = ssub.s32 %s30, 1
        // Predicated region
        $region13: #{hlc_forward.1} parent=11 // pred_check
          %p343 = pneg %p77
        $region14: #{hlc_forward.1} parent=11 // pred_check_branch
          %345 = sbr.rel (%p343) target = $region16
        $region15: #{hlc_forward.1} parent=11 // pred_region
          %s347 = ssub.s32 5888, 5888
          %348 = vsyncadd [#allocation3], %s347
          %s349 = sshll.u32 [#allocation2], 4
          %s350 = int_to_ptr.vmem [resolvable:$true] %s349
          %355 = dma.hbm_to_vmem [thread:$0]  %s1, 5888, %s350, [#allocation3], 256, 256, 16
        $region16: #{hlc_forward.1} parent=11 // pred_fallthru
          _
        // Predicated region
        $region17: #{hlc_forward.1} parent=11 // pred_check
          %p356 = pneg %p98
        $region18: #{hlc_forward.1} parent=11 // pred_check_branch
          %358 = sbr.rel (%p356) target = $region20
        $region19: #{hlc_forward.1} parent=11 // pred_region
          _
        $region20: #{hlc_forward.1} parent=11 // pred_fallthru
          _
        // Predicated region
        $region21: #{hlc_forward.1} parent=11 // pred_check
          %p359 = pneg %p119
        $region22: #{hlc_forward.1} parent=11 // pred_check_branch
          %361 = sbr.rel (%p359) target = $region24
        $region23: #{hlc_forward.1} parent=11 // pred_region
          _
        $region24: #{hlc_forward.1} parent=11 // pred_fallthru
          _
        // Predicated region
        $region25: #{hlc_forward.1} parent=11 // pred_check
          %p362 = pneg %p140
        $region26: #{hlc_forward.1} parent=11 // pred_check_branch
          %364 = sbr.rel (%p362) target = $region28
        $region27: #{hlc_forward.1} parent=11 // pred_region
          _
        $region28: #{hlc_forward.1} parent=11 // pred_fallthru
          _
        // Predicated region
        $region29: #{hlc_forward.1} parent=11 // pred_check
          %p365 = pneg %p161
        $region30: #{hlc_forward.1} parent=11 // pred_check_branch
          %367 = sbr.rel (%p365) target = $region32
        $region31: #{hlc_forward.1} parent=11 // pred_region
          %s369 = ssub.s32 2048, 2048
          %370 = vsyncadd [#allocation6], %s369
          %s371 = sshll.u32 [#allocation5], 4
          %s372 = int_to_ptr.vmem [resolvable:$true] %s371
          %377 = dma.hbm_to_vmem [thread:$0]  %s5, 2048, %s372, [#allocation6], 128, 128, 8
        $region32: #{hlc_forward.1} parent=11 // pred_fallthru
          _
        // Predicated region
        $region33: #{hlc_forward.1} parent=11 // pred_check
          %p378 = pneg %p182
        $region34: #{hlc_forward.1} parent=11 // pred_check_branch
          %380 = sbr.rel (%p378) target = $region36
        $region35: #{hlc_forward.1} parent=11 // pred_region
          _
        $region36: #{hlc_forward.1} parent=11 // pred_fallthru
          _
        // Predicated region
        $region37: #{hlc_forward.1} parent=11 // pred_check
          %p381 = pneg %p203
        $region38: #{hlc_forward.1} parent=11 // pred_check_branch
          %383 = sbr.rel (%p381) target = $region40
        $region39: #{hlc_forward.1} parent=11 // pred_region
          %s385 = ssub.s32 16384, 16384
          %386 = vsyncadd [#allocation6], %s385
          %s387 = sshll.u32 [#allocation7], 4
          %s388 = int_to_ptr.vmem [resolvable:$true] %s387
          %393 = dma.hbm_to_vmem [thread:$0]  %s7, 16384, %s388, [#allocation6], 1024, 1024, 64
        $region40: #{hlc_forward.1} parent=11 // pred_fallthru
          _
        // Predicated region
        $region41: #{hlc_forward.1} parent=11 // pred_check
          %p394 = pneg %p224
        $region42: #{hlc_forward.1} parent=11 // pred_check_branch
          %396 = sbr.rel (%p394) target = $region44
        $region43: #{hlc_forward.1} parent=11 // pred_region
          _
        $region44: #{hlc_forward.1} parent=11 // pred_fallthru
          _
      $region12: #{hlc_forward.1} parent=5 // pred_fallthru
        _
      %p397 = scmp.lt.s32.totalorder %s30, 4
      // Predicated region
      $region45: #{hlc_forward.1} parent=5 // pred_check
        %p398 = pneg %p397
      $region46: #{hlc_forward.1} parent=5 // pred_check_branch
        %400 = sbr.rel (%p398) target = $region48
      $region47: #{hlc_forward.1} parent=5 // pred_region
        // Predicated region
        $region49: #{hlc_forward.1} parent=47 // pred_check
          %p401 = pneg %p50
        $region50: #{hlc_forward.1} parent=47 // pred_check_branch
          %403 = sbr.rel (%p401) target = $region52
        $region51: #{hlc_forward.1} parent=47 // pred_region
          %s404 = smul.u32 2, %s30
          %p405 = scmp.lt.s32.totalorder %s404, 7
          %s406 = scalar_select %p405, %s404, 7
          %s407 = smul.addr %s406, 2
          %s408 = smul.addr %s407, 8
          %s409 = scalar_lea.vmem %s0, %s408
          %s410 = smul.u32 2, %s30
        $region52: #{hlc_forward.1} parent=47 // pred_fallthru
          _
        // Predicated region
        $region53: #{hlc_forward.1} parent=47 // pred_check
          %p411 = pneg %p244
        $region54: #{hlc_forward.1} parent=47 // pred_check_branch
          %413 = sbr.rel (%p411) target = $region56
        $region55: #{hlc_forward.1} parent=47 // pred_region
          %s414 = sand.u32 %s234, 1
          %s415 = scalar_lea.sflag [#allocation9], %s414
          %s416 = sand.u32 %s234, 1
          %s417 = smul.addr %s416, 64
          %s418 = scalar_lea.vmem [#allocation8], %s417
          %s419 = smul.u32 2, %s30
          %s421 = ssub.s32 1024, 1024
          %422 = vsyncadd %s415, %s421
          %s423 = smul.addr %s419, 4
          %s424 = smul.addr %s423, 128
          %s425 = scalar_lea.hbm %s9, %s424
          %s426 = sshll.u32 %s418, 4
          %s427 = int_to_ptr.vmem [resolvable:$true] %s426
          %432 = dma.hbm_to_vmem [thread:$0]  %s425, 1024, %s427, %s415, 512, 512, 32
        $region56: #{hlc_forward.1} parent=47 // pred_fallthru
          _
      $region48: #{hlc_forward.1} parent=5 // pred_fallthru
        _
      %p433 = scmp.le.s32.totalorder 1, %s30
      %p434 = scmp.lt.s32.totalorder %s30, 5
      %p435 = pnand %p433, %p434
      %p436 = pneg %p435
      // Predicated region
      $region57: #{hlc_forward.1} parent=5 // pred_check
        _
      $region58: #{hlc_forward.1} parent=5 // pred_check_branch
        %438 = sbr.rel (%p435) target = $region60
      $region59: #{hlc_forward.1} parent=5 // pred_region
        %s439 = ssub.s32 %s30, 1
        // Predicated region
        $region61: #{hlc_forward.1} parent=59 // pred_check
          %p440 = pneg %p77
        $region62: #{hlc_forward.1} parent=59 // pred_check_branch
          %442 = sbr.rel (%p440) target = $region64
        $region63: #{hlc_forward.1} parent=59 // pred_region
          %443 = dma.done [#allocation3], 5888
        $region64: #{hlc_forward.1} parent=59 // pred_fallthru
          _
        // Predicated region
        $region65: #{hlc_forward.1} parent=59 // pred_check
          %p444 = pneg %p161
        $region66: #{hlc_forward.1} parent=59 // pred_check_branch
          %446 = sbr.rel (%p444) target = $region68
        $region67: #{hlc_forward.1} parent=59 // pred_region
          %447 = dma.done [#allocation6], 2048
        $region68: #{hlc_forward.1} parent=59 // pred_fallthru
          _
        // Predicated region
        $region69: #{hlc_forward.1} parent=59 // pred_check
          %p448 = pneg %p203
        $region70: #{hlc_forward.1} parent=59 // pred_check_branch
          %450 = sbr.rel (%p448) target = $region72
        $region71: #{hlc_forward.1} parent=59 // pred_region
          %451 = dma.done [#allocation6], 16384
        $region72: #{hlc_forward.1} parent=59 // pred_fallthru
          _
        %s452 = sand.u32 %s237, 1
        %s453 = scalar_lea.sflag [#allocation9], %s452
        %s454 = sand.u32 %s237, 1
        %s455 = smul.addr %s454, 64
        %s456 = scalar_lea.vmem [#allocation8], %s455
        // Predicated region
        $region73: #{hlc_forward.1} parent=59 // pred_check
          %p457 = pneg %p250
        $region74: #{hlc_forward.1} parent=59 // pred_check_branch
          %459 = sbr.rel (%p457) target = $region76
        $region75: #{hlc_forward.1} parent=59 // pred_region
          %460 = dma.done %s453, 1024
        $region76: #{hlc_forward.1} parent=59 // pred_fallthru
          _
        %s461 = smul.u32 2, %s35
        %p462 = scmp.lt.s32.totalorder %s461, 7
        %s463 = scalar_select %p462, %s461, 7
        %s464 = smul.addr %s463, 2
        %s465 = smul.addr %s464, 8
        %s466 = scalar_lea.vmem %s0, %s465
        %p467 = pneg %p56
        %p468 = pneg %p53
        %p469 = pneg %p77
        %p470 = pneg %p74
        %p471 = pneg %p98
        %p472 = pneg %p95
        %p473 = pneg %p119
        %p474 = pneg %p116
        %p475 = pneg %p140
        %p476 = pneg %p137
        %p477 = pneg %p161
        %p478 = pneg %p158
        %p479 = pneg %p182
        %p480 = pneg %p179
        %p481 = pneg %p203
        %p482 = pneg %p200
        %p483 = pneg %p224
        %p484 = pneg %p221
        %s485 = sand.u32 %s237, 1
        %s486 = scalar_lea.sflag [#allocation9], %s485
        %s487 = sand.u32 %s237, 1
        %s488 = smul.addr %s487, 64
        %s489 = scalar_lea.vmem [#allocation8], %s488
        %p490 = pneg %p250
        %p491 = pneg %p247
        %p492 = pneg %p276
        %p493 = pneg %p273
        %s494 = sand.u32 %s263, 1
        %s495 = scalar_lea.sflag [#allocation4], %s494
        %s496 = sand.u32 %s263, 1
        %s497 = smul.addr %s496, 64
        %s498 = scalar_lea.vmem [#allocation10], %s497
        %p499 = pneg %p302
        %p500 = pneg %p299
        %s501 = sand.u32 %s35, 1
        %s502 = scalar_lea.sflag [#allocation12], %s501
        %s503 = sand.u32 %s289, 1
        %s504 = smul.addr %s503, 64
        %s505 = scalar_lea.vmem [#allocation11], %s504
        %p506 = pneg %p328
        %p507 = pneg %p325
        %s508 = sand.u32 %s35, 1
        %s509 = scalar_lea.sflag [#allocation12], %s508
        %s510 = sand.u32 %s315, 1
        %s511 = smul.addr %s510, 64
        %s512 = scalar_lea.vmem [#allocation13], %s511
        %s513 = smul.u32 2, %s35
        %p514 = scmp.lt.s32.totalorder %s513, 7
        %s515 = scalar_select %p514, %s513, 7
        %s516 = smul.addr %s515, 2
        %s517 = smul.addr %s516, 8
        %s518 = scalar_lea.vmem %s0, %s517
        %s519 = smul.u32 2, %s35
        %s520 = smul.u32 2, %s35
        %s521 = smul.u32 2, %s35
        %s522 = smul.u32 2, %s35
        %s523 = smul.u32 2, %s35
        %v524 = vld [vmem:[%s518] sm:$0xff]
        %v525 = vld [vmem:[%s518 + $0x8] sm:$0xff]
        %v526 = vld [vmem:[%s518 + $0x10] sm:$0xff]
        %v527 = vld [vmem:[%s518 + $0x18] sm:$0xff]
        %v528 = vld [vmem:[#allocation2] sm:$0xff]
        %v529 = vld [vmem:[#allocation2 + $0x8] sm:$0xff]
        %v530 = vld [vmem:[#allocation2 + $0x10] sm:$0xff]
        %v531 = vld [vmem:[#allocation2 + $0x18] sm:$0xff]
        %v532 = vld [vmem:[#allocation2 + $0x20] sm:$0xff]
        %v533 = vld [vmem:[#allocation2 + $0x28] sm:$0xff]
        %v534 = vld [vmem:[#allocation2 + $0x30] sm:$0xff]
        %v535 = vld [vmem:[#allocation2 + $0x38] sm:$0xff]
        %v536 = vld [vmem:[#allocation2 + $0x40] sm:$0xff]
        %v537 = vld [vmem:[#allocation2 + $0x48] sm:$0xff]
        %v538 = vld [vmem:[#allocation2 + $0x50] sm:$0xff]
        %v539 = vld [vmem:[#allocation2 + $0x58] sm:$0xff]
        %v540 = vld [vmem:[#allocation2 + $0x60] sm:$0xff]
        %v541 = vld [vmem:[#allocation2 + $0x68] sm:$0xff]
        %v542 = vld [vmem:[#allocation2 + $0x70] sm:$0xff]
        %v543 = vld [vmem:[#allocation2 + $0x78] sm:$0xff]
        %v544 = vld [vmem:[#allocation2 + $0x80] sm:$0xff]
        %v545 = vld [vmem:[#allocation2 + $0x88] sm:$0xff]
        %v546 = vld [vmem:[#allocation2 + $0x90] sm:$0xff]
        %v547 = vld [vmem:[#allocation2 + $0x98] sm:$0xff]
        %v548 = vld [vmem:[#allocation2 + $0xa0] sm:$0xff]
        %v549 = vld [vmem:[#allocation2 + $0xa8] sm:$0xff]
        %v550 = vld [vmem:[#allocation2 + $0xb0] sm:$0xff]
        %v551 = vld [vmem:[#allocation2 + $0xb8] sm:$0xff]
        %v552 = vld [vmem:[#allocation2 + $0xc0] sm:$0xff]
        %v553 = vld [vmem:[#allocation2 + $0xc8] sm:$0xff]
        %v554 = vld [vmem:[#allocation2 + $0xd0] sm:$0xff]
        %v555 = vld [vmem:[#allocation2 + $0xd8] sm:$0xff]
        %v556 = vld [vmem:[#allocation2 + $0xe0] sm:$0xff]
        %v557 = vld [vmem:[#allocation2 + $0xe8] sm:$0xff]
        %v558 = vld [vmem:[#allocation2 + $0xf0] sm:$0xff]
        %v559 = vld [vmem:[#allocation2 + $0xf8] sm:$0xff]
        %v560 = vld [vmem:[#allocation2 + $0x100] sm:$0xff]
        %v561 = vld [vmem:[#allocation2 + $0x108] sm:$0xff]
        %v562 = vld [vmem:[#allocation2 + $0x110] sm:$0xff]
        %v563 = vld [vmem:[#allocation2 + $0x118] sm:$0xff]
        %v564 = vld [vmem:[#allocation2 + $0x120] sm:$0xff]
        %v565 = vld [vmem:[#allocation2 + $0x128] sm:$0xff]
        %v566 = vld [vmem:[#allocation2 + $0x130] sm:$0xff]
        %v567 = vld [vmem:[#allocation2 + $0x138] sm:$0xff]
        %v568 = vld [vmem:[#allocation2 + $0x140] sm:$0xff]
        %v569 = vld [vmem:[#allocation2 + $0x148] sm:$0xff]
        %v570 = vld [vmem:[#allocation2 + $0x150] sm:$0xff]
        %v571 = vld [vmem:[#allocation2 + $0x158] sm:$0xff]
        %v572 = vld [vmem:[#allocation2 + $0x160] sm:$0xf]
        %v573 = vld [vmem:[#allocation2 + $0x168] sm:$0xf]
        %v574 = vld [vmem:[%s2] sm:$0x3]
        %v576 = vlaneseq
        %v577 = vshrl.u32 %v576, 7
        %v578 = vsub.s32 0, %v577
        %v579 = vrot.slane %v574, %v578
        %v580 = vlaneseq
        %v581 = vshrl.u32 %v580, 7
        %v582 = vsub.s32 1, %v581
        %v583 = vrot.slane %v574, %v582
        %vm586 = vcmask 424960
        %v588 = vsel %vm586, %v525, 0
        %v591 = vsel %vm586, %v527, 0
        %vm593 = vcmask 1043456
        %v595 = vsel %vm593, %v572, 0
        %v598 = vsel %vm593, %v573, 0
        %600 = vmatprep.subr.mxu0 %v529
        %601 = vmatpush1.msra.mxu0 %v528
        %602 = vmatprep.subr.mxu0 %v531
        %603 = vmatpush1.msra.mxu0 %v530
        %604 = vmatprep.subr.mxu0 %v533
        %605 = vmatpush1.msra.mxu0 %v532
        %606 = vmatprep.subr.mxu0 %v535
        %607 = vmatpush1.msra.mxu0 %v534
        %608 = vmatprep.subr.mxu0 %v537
        %609 = vmatpush1.msra.mxu0 %v536
        %610 = vmatprep.subr.mxu0 %v539
        %611 = vmatpush1.msra.mxu0 %v538
        %612 = vmatprep.subr.mxu0 %v541
        %613 = vmatpush1.msra.mxu0 %v540
        %614 = vmatprep.subr.mxu0 %v543
        %615 = vmatpush1.msra.mxu0 %v542
        %616 = vmatprep.subr.mxu0 %v545
        %617 = vmatpush1.msra.mxu0 %v544
        %618 = vmatprep.subr.mxu0 %v547
        %619 = vmatpush1.msra.mxu0 %v546
        %620 = vmatprep.subr.mxu0 %v549
        %621 = vmatpush1.msra.mxu0 %v548
        %622 = vmatprep.subr.mxu0 %v551
        %623 = vmatpush1.msra.mxu0 %v550
        %624 = vmatprep.subr.mxu0 %v553
        %625 = vmatpush1.msra.mxu0 %v552
        %626 = vmatprep.subr.mxu0 %v555
        %627 = vmatpush1.msra.mxu0 %v554
        %628 = vmatprep.subr.mxu0 %v557
        %629 = vmatpush1.msra.mxu0 %v556
        %630 = vmatprep.subr.mxu0 %v559
        %631 = vmatpush1.msra.mxu0 %v558
        %632 = vmatprep.subr.mxu0 %v561
        %633 = vmatpush1.msra.mxu0 %v560
        %634 = vmatprep.subr.mxu0 %v563
        %635 = vmatpush1.msra.mxu0 %v562
        %636 = vmatprep.subr.mxu0 %v565
        %637 = vmatpush1.msra.mxu0 %v564
        %638 = vmatprep.subr.mxu0 %v567
        %639 = vmatpush1.msra.mxu0 %v566
        %640 = vmatprep.subr.mxu0 %v569
        %641 = vmatpush1.msra.mxu0 %v568
        %642 = vmatprep.subr.mxu0 %v571
        %643 = vmatpush1.msra.mxu0 %v570
        %644 = vmatprep.subr.mxu0 %v598
        %645 = vmatpush1.msra.mxu0 %v595
        %646 = vmatprep.subr.mxu0 0.0
        %647 = vmatpush1.msra.mxu0 0.0
        %648 = vmatprep.subr.mxu0 0.0
        %649 = vmatpush1.msra.mxu0 0.0
        %650 = vmatprep.subr.mxu0 0.0
        %651 = vmatpush1.msra.mxu0 0.0
        %652 = vmatprep.subr.mxu0 0.0
        %653 = vmatpush1.msra.mxu0 0.0
        %654 = vmatprep.subr.mxu0 0.0
        %655 = vmatpush1.msra.mxu0 0.0
        %656 = vmatprep.subr.mxu0 0.0
        %657 = vmatpush1.msra.mxu0 0.0
        %658 = vmatprep.subr.mxu0 0.0
        %659 = vmatpush1.msra.mxu0 0.0
        %660 = vmatprep.subr.mxu0 0.0
        %661 = vmatpush1.msra.mxu0 0.0
        %662 = vmatprep.subr.mxu0 0.0
        %663 = vmatpush1.msra.mxu0 0.0
        %664 = vmatprep.mubr.f32.mxu0 %v588
        %665 = vmatmul.mubr.f32.gmra.mrb[0].mxu0 %v524
        %v666 = vpop.f32.mrb[0].mxu0
        %v667 = vadd.f32 %v579, %v666
        %v668 = vpop.f32.mrb[0].mxu0
        %v669 = vadd.f32 %v583, %v668
        %670 = vmatprep.mubr.f32.mxu0 %v591
        %671 = vmatmul.mubr.f32.gmra.mrb[0].mxu0 %v526
        %v672 = vpop.f32.mrb[0].mxu0
        %v673 = vadd.f32 %v579, %v672
        %v674 = vpop.f32.mrb[0].mxu0
        %v675 = vadd.f32 %v583, %v674
        %676 = vdwg.mxu0
        %v677 = vmax.f32 %v667, 0.0
        %v678 = vmax.f32 %v669, 0.0
        %v679 = vmax.f32 %v673, 0.0
        %v680 = vmax.f32 %v675, 0.0
        %v681 = vld [vmem:[%s3] sm:$0xff]
        %v682 = vld [vmem:[%s3 + $0x8] sm:$0xff]
        %v683 = vld [vmem:[%s3 + $0x10] sm:$0xff]
        %v684 = vld [vmem:[%s3 + $0x18] sm:$0xff]
        %v685 = vld [vmem:[%s3 + $0x20] sm:$0xff]
        %v686 = vld [vmem:[%s3 + $0x28] sm:$0xff]
        %v687 = vld [vmem:[%s3 + $0x30] sm:$0xff]
        %v688 = vld [vmem:[%s3 + $0x38] sm:$0xff]
        %v689 = vld [vmem:[%s3 + $0x40] sm:$0xff]
        %v690 = vld [vmem:[%s3 + $0x48] sm:$0xff]
        %v691 = vld [vmem:[%s3 + $0x50] sm:$0xff]
        %v692 = vld [vmem:[%s3 + $0x58] sm:$0xff]
        %v693 = vld [vmem:[%s3 + $0x60] sm:$0xff]
        %v694 = vld [vmem:[%s3 + $0x68] sm:$0xff]
        %v695 = vld [vmem:[%s3 + $0x70] sm:$0xff]
        %v696 = vld [vmem:[%s3 + $0x78] sm:$0xff]
        %v697 = vld [vmem:[%s3 + $0x80] sm:$0xff]
        %v698 = vld [vmem:[%s3 + $0x88] sm:$0xff]
        %v699 = vld [vmem:[%s3 + $0x90] sm:$0xff]
        %v700 = vld [vmem:[%s3 + $0x98] sm:$0xff]
        %v701 = vld [vmem:[%s3 + $0xa0] sm:$0xff]
        %v702 = vld [vmem:[%s3 + $0xa8] sm:$0xff]
        %v703 = vld [vmem:[%s3 + $0xb0] sm:$0xff]
        %v704 = vld [vmem:[%s3 + $0xb8] sm:$0xff]
        %v705 = vld [vmem:[%s3 + $0xc0] sm:$0xff]
        %v706 = vld [vmem:[%s3 + $0xc8] sm:$0xff]
        %v707 = vld [vmem:[%s3 + $0xd0] sm:$0xff]
        %v708 = vld [vmem:[%s3 + $0xd8] sm:$0xff]
        %v709 = vld [vmem:[%s3 + $0xe0] sm:$0xff]
        %v710 = vld [vmem:[%s3 + $0xe8] sm:$0xff]
        %v711 = vld [vmem:[%s3 + $0xf0] sm:$0xff]
        %v712 = vld [vmem:[%s3 + $0xf8] sm:$0xff]
        %v713 = vld [vmem:[%s4] sm:$0x1]
        %v715 = vlaneseq
        %v716 = vshrl.u32 %v715, 7
        %v717 = vsub.s32 0, %v716
        %v718 = vrot.slane %v713, %v717
        %720 = vmatprep.subr.mxu0 0.0
        %721 = vmatpush1.msra.mxu0 %v681
        %722 = vmatprep.subr.mxu0 0.0
        %723 = vmatpush1.msra.mxu0 %v682
        %724 = vmatprep.subr.mxu0 0.0
        %725 = vmatpush1.msra.mxu0 %v683
        %726 = vmatprep.subr.mxu0 0.0
        %727 = vmatpush1.msra.mxu0 %v684
        %728 = vmatprep.subr.mxu0 0.0
        %729 = vmatpush1.msra.mxu0 %v685
        %730 = vmatprep.subr.mxu0 0.0
        %731 = vmatpush1.msra.mxu0 %v686
        %732 = vmatprep.subr.mxu0 0.0
        %733 = vmatpush1.msra.mxu0 %v687
        %734 = vmatprep.subr.mxu0 0.0
        %735 = vmatpush1.msra.mxu0 %v688
        %736 = vmatprep.subr.mxu0 0.0
        %737 = vmatpush1.msra.mxu0 %v689
        %738 = vmatprep.subr.mxu0 0.0
        %739 = vmatpush1.msra.mxu0 %v690
        %740 = vmatprep.subr.mxu0 0.0
        %741 = vmatpush1.msra.mxu0 %v691
        %742 = vmatprep.subr.mxu0 0.0
        %743 = vmatpush1.msra.mxu0 %v692
        %744 = vmatprep.subr.mxu0 0.0
        %745 = vmatpush1.msra.mxu0 %v693
        %746 = vmatprep.subr.mxu0 0.0
        %747 = vmatpush1.msra.mxu0 %v694
        %748 = vmatprep.subr.mxu0 0.0
        %749 = vmatpush1.msra.mxu0 %v695
        %750 = vmatprep.subr.mxu0 0.0
        %751 = vmatpush1.msra.mxu0 %v696
        %752 = vmatprep.subr.mxu0 0.0
        %753 = vmatpush1.msra.mxu0 %v697
        %754 = vmatprep.subr.mxu0 0.0
        %755 = vmatpush1.msra.mxu0 %v698
        %756 = vmatprep.subr.mxu0 0.0
        %757 = vmatpush1.msra.mxu0 %v699
        %758 = vmatprep.subr.mxu0 0.0
        %759 = vmatpush1.msra.mxu0 %v700
        %760 = vmatprep.subr.mxu0 0.0
        %761 = vmatpush1.msra.mxu0 %v701
        %762 = vmatprep.subr.mxu0 0.0
        %763 = vmatpush1.msra.mxu0 %v702
        %764 = vmatprep.subr.mxu0 0.0
        %765 = vmatpush1.msra.mxu0 %v703
        %766 = vmatprep.subr.mxu0 0.0
        %767 = vmatpush1.msra.mxu0 %v704
        %768 = vmatprep.subr.mxu0 0.0
        %769 = vmatpush1.msra.mxu0 %v705
        %770 = vmatprep.subr.mxu0 0.0
        %771 = vmatpush1.msra.mxu0 %v706
        %772 = vmatprep.subr.mxu0 0.0
        %773 = vmatpush1.msra.mxu0 %v707
        %774 = vmatprep.subr.mxu0 0.0
        %775 = vmatpush1.msra.mxu0 %v708
        %776 = vmatprep.subr.mxu0 0.0
        %777 = vmatpush1.msra.mxu0 %v709
        %778 = vmatprep.subr.mxu0 0.0
        %779 = vmatpush1.msra.mxu0 %v710
        %780 = vmatprep.subr.mxu0 0.0
        %781 = vmatpush1.msra.mxu0 %v711
        %782 = vmatprep.subr.mxu0 0.0
        %783 = vmatpush1.msra.mxu0 %v712
        %784 = vmatprep.mubr.f32.mxu0 %v678
        %785 = vmatmul.mubr.f32.gmra.mrb[0].mxu0 %v677
        %v786 = vpop.f32.mrb[0].mxu0
        %v787 = vadd.f32 %v718, %v786
        %v788 = vpop.f32.mrb[0].mxu0
        %789 = vmatprep.mubr.f32.mxu0 %v680
        %790 = vmatmul.mubr.f32.gmra.mrb[0].mxu0 %v679
        %v791 = vpop.f32.mrb[0].mxu0
        %v792 = vadd.f32 %v718, %v791
        %v793 = vpop.f32.mrb[0].mxu0
        %794 = vdwg.mxu0
        %v795 = vmax.f32 %v787, 0.0
        %v796 = vmax.f32 %v792, 0.0
        %v797 = vld [vmem:[#allocation5] sm:$0xff]
        %v798 = vld [vmem:[#allocation5 + $0x8] sm:$0xff]
        %v799 = vld [vmem:[#allocation5 + $0x10] sm:$0xff]
        %v800 = vld [vmem:[#allocation5 + $0x18] sm:$0xff]
        %v801 = vld [vmem:[#allocation5 + $0x20] sm:$0xff]
        %v802 = vld [vmem:[#allocation5 + $0x28] sm:$0xff]
        %v803 = vld [vmem:[#allocation5 + $0x30] sm:$0xff]
        %v804 = vld [vmem:[#allocation5 + $0x38] sm:$0xff]
        %v805 = vld [vmem:[#allocation5 + $0x40] sm:$0xff]
        %v806 = vld [vmem:[#allocation5 + $0x48] sm:$0xff]
        %v807 = vld [vmem:[#allocation5 + $0x50] sm:$0xff]
        %v808 = vld [vmem:[#allocation5 + $0x58] sm:$0xff]
        %v809 = vld [vmem:[#allocation5 + $0x60] sm:$0xff]
        %v810 = vld [vmem:[#allocation5 + $0x68] sm:$0xff]
        %v811 = vld [vmem:[#allocation5 + $0x70] sm:$0xff]
        %v812 = vld [vmem:[#allocation5 + $0x78] sm:$0xff]
        %v813 = vld [vmem:[%s6] sm:$0x1]
        %v815 = vlaneseq
        %v816 = vshrl.u32 %v815, 7
        %v817 = vsub.s32 0, %v816
        %v818 = vrot.slane %v813, %v817
        %820 = vmatprep.subr.mxu0 0.0
        %821 = vmatpush1.msra.mxu0 %v797
        %822 = vmatprep.subr.mxu0 0.0
        %823 = vmatpush1.msra.mxu0 %v798
        %824 = vmatprep.subr.mxu0 0.0
        %825 = vmatpush1.msra.mxu0 %v799
        %826 = vmatprep.subr.mxu0 0.0
        %827 = vmatpush1.msra.mxu0 %v800
        %828 = vmatprep.subr.mxu0 0.0
        %829 = vmatpush1.msra.mxu0 %v801
        %830 = vmatprep.subr.mxu0 0.0
        %831 = vmatpush1.msra.mxu0 %v802
        %832 = vmatprep.subr.mxu0 0.0
        %833 = vmatpush1.msra.mxu0 %v803
        %834 = vmatprep.subr.mxu0 0.0
        %835 = vmatpush1.msra.mxu0 %v804
        %836 = vmatprep.subr.mxu0 0.0
        %837 = vmatpush1.msra.mxu0 %v805
        %838 = vmatprep.subr.mxu0 0.0
        %839 = vmatpush1.msra.mxu0 %v806
        %840 = vmatprep.subr.mxu0 0.0
        %841 = vmatpush1.msra.mxu0 %v807
        %842 = vmatprep.subr.mxu0 0.0
        %843 = vmatpush1.msra.mxu0 %v808
        %844 = vmatprep.subr.mxu0 0.0
        %845 = vmatpush1.msra.mxu0 %v809
        %846 = vmatprep.subr.mxu0 0.0
        %847 = vmatpush1.msra.mxu0 %v810
        %848 = vmatprep.subr.mxu0 0.0
        %849 = vmatpush1.msra.mxu0 %v811
        %850 = vmatprep.subr.mxu0 0.0
        %851 = vmatpush1.msra.mxu0 %v812
        %852 = vmatprep.subr.mxu0 0.0
        %853 = vmatpush1.msra.mxu0 0.0
        %854 = vmatprep.subr.mxu0 0.0
        %855 = vmatpush1.msra.mxu0 0.0
        %856 = vmatprep.subr.mxu0 0.0
        %857 = vmatpush1.msra.mxu0 0.0
        %858 = vmatprep.subr.mxu0 0.0
        %859 = vmatpush1.msra.mxu0 0.0
        %860 = vmatprep.subr.mxu0 0.0
        %861 = vmatpush1.msra.mxu0 0.0
        %862 = vmatprep.subr.mxu0 0.0
        %863 = vmatpush1.msra.mxu0 0.0
        %864 = vmatprep.subr.mxu0 0.0
        %865 = vmatpush1.msra.mxu0 0.0
        %866 = vmatprep.subr.mxu0 0.0
        %867 = vmatpush1.msra.mxu0 0.0
        %868 = vmatprep.subr.mxu0 0.0
        %869 = vmatpush1.msra.mxu0 0.0
        %870 = vmatprep.subr.mxu0 0.0
        %871 = vmatpush1.msra.mxu0 0.0
        %872 = vmatprep.subr.mxu0 0.0
        %873 = vmatpush1.msra.mxu0 0.0
        %874 = vmatprep.subr.mxu0 0.0
        %875 = vmatpush1.msra.mxu0 0.0
        %876 = vmatprep.subr.mxu0 0.0
        %877 = vmatpush1.msra.mxu0 0.0
        %878 = vmatprep.subr.mxu0 0.0
        %879 = vmatpush1.msra.mxu0 0.0
        %880 = vmatprep.subr.mxu0 0.0
        %881 = vmatpush1.msra.mxu0 0.0
        %882 = vmatprep.subr.mxu0 0.0
        %883 = vmatpush1.msra.mxu0 0.0
        %884 = vmatprep.mubr.f32.mxu0 0.0
        %885 = vmatmul.mubr.f32.gmra.mrb[0].mxu0 %v795
        %v886 = vpop.f32.mrb[0].mxu0
        %v887 = vadd.f32 %v818, %v886
        %v888 = vpop.f32.mrb[0].mxu0
        %889 = vmatprep.mubr.f32.mxu0 0.0
        %890 = vmatmul.mubr.f32.gmra.mrb[0].mxu0 %v796
        %v891 = vpop.f32.mrb[0].mxu0
        %v892 = vadd.f32 %v818, %v891
        %v893 = vpop.f32.mrb[0].mxu0
        %894 = vdwg.mxu0
        %v895 = vtanh.pop %v887
        %v896 = vtanh.pop %v892
        %v897 = vld [vmem:[#allocation7] sm:$0xff]
        %v898 = vld [vmem:[#allocation7 + $0x8] sm:$0xff]
        %v899 = vld [vmem:[#allocation7 + $0x10] sm:$0xff]
        %v900 = vld [vmem:[#allocation7 + $0x18] sm:$0xff]
        %v901 = vld [vmem:[#allocation7 + $0x20] sm:$0xff]
        %v902 = vld [vmem:[#allocation7 + $0x28] sm:$0xff]
        %v903 = vld [vmem:[#allocation7 + $0x30] sm:$0xff]
        %v904 = vld [vmem:[#allocation7 + $0x38] sm:$0xff]
        %v905 = vld [vmem:[#allocation7 + $0x40] sm:$0xff]
        %v906 = vld [vmem:[#allocation7 + $0x48] sm:$0xff]
        %v907 = vld [vmem:[#allocation7 + $0x50] sm:$0xff]
        %v908 = vld [vmem:[#allocation7 + $0x58] sm:$0xff]
        %v909 = vld [vmem:[#allocation7 + $0x60] sm:$0xff]
        %v910 = vld [vmem:[#allocation7 + $0x68] sm:$0xff]
        %v911 = vld [vmem:[#allocation7 + $0x70] sm:$0xff]
        %v912 = vld [vmem:[#allocation7 + $0x78] sm:$0xff]
        %v913 = vld [vmem:[#allocation7 + $0x80] sm:$0xff]
        %v914 = vld [vmem:[#allocation7 + $0x88] sm:$0xff]
        %v915 = vld [vmem:[#allocation7 + $0x90] sm:$0xff]
        %v916 = vld [vmem:[#allocation7 + $0x98] sm:$0xff]
        %v917 = vld [vmem:[#allocation7 + $0xa0] sm:$0xff]
        %v918 = vld [vmem:[#allocation7 + $0xa8] sm:$0xff]
        %v919 = vld [vmem:[#allocation7 + $0xb0] sm:$0xff]
        %v920 = vld [vmem:[#allocation7 + $0xb8] sm:$0xff]
        %v921 = vld [vmem:[#allocation7 + $0xc0] sm:$0xff]
        %v922 = vld [vmem:[#allocation7 + $0xc8] sm:$0xff]
        %v923 = vld [vmem:[#allocation7 + $0xd0] sm:$0xff]
        %v924 = vld [vmem:[#allocation7 + $0xd8] sm:$0xff]
        %v925 = vld [vmem:[#allocation7 + $0xe0] sm:$0xff]
        %v926 = vld [vmem:[#allocation7 + $0xe8] sm:$0xff]
        %v927 = vld [vmem:[#allocation7 + $0xf0] sm:$0xff]
        %v928 = vld [vmem:[#allocation7 + $0xf8] sm:$0xff]
        %v929 = vld [vmem:[#allocation7 + $0x100] sm:$0xff]
        %v930 = vld [vmem:[#allocation7 + $0x108] sm:$0xff]
        %v931 = vld [vmem:[#allocation7 + $0x110] sm:$0xff]
        %v932 = vld [vmem:[#allocation7 + $0x118] sm:$0xff]
        %v933 = vld [vmem:[#allocation7 + $0x120] sm:$0xff]
        %v934 = vld [vmem:[#allocation7 + $0x128] sm:$0xff]
        %v935 = vld [vmem:[#allocation7 + $0x130] sm:$0xff]
        %v936 = vld [vmem:[#allocation7 + $0x138] sm:$0xff]
        %v937 = vld [vmem:[#allocation7 + $0x140] sm:$0xff]
        %v938 = vld [vmem:[#allocation7 + $0x148] sm:$0xff]
        %v939 = vld [vmem:[#allocation7 + $0x150] sm:$0xff]
        %v940 = vld [vmem:[#allocation7 + $0x158] sm:$0xff]
        %v941 = vld [vmem:[#allocation7 + $0x160] sm:$0xff]
        %v942 = vld [vmem:[#allocation7 + $0x168] sm:$0xff]
        %v943 = vld [vmem:[#allocation7 + $0x170] sm:$0xff]
        %v944 = vld [vmem:[#allocation7 + $0x178] sm:$0xff]
        %v945 = vld [vmem:[#allocation7 + $0x180] sm:$0xff]
        %v946 = vld [vmem:[#allocation7 + $0x188] sm:$0xff]
        %v947 = vld [vmem:[#allocation7 + $0x190] sm:$0xff]
        %v948 = vld [vmem:[#allocation7 + $0x198] sm:$0xff]
        %v949 = vld [vmem:[#allocation7 + $0x1a0] sm:$0xff]
        %v950 = vld [vmem:[#allocation7 + $0x1a8] sm:$0xff]
        %v951 = vld [vmem:[#allocation7 + $0x1b0] sm:$0xff]
        %v952 = vld [vmem:[#allocation7 + $0x1b8] sm:$0xff]
        %v953 = vld [vmem:[#allocation7 + $0x1c0] sm:$0xff]
        %v954 = vld [vmem:[#allocation7 + $0x1c8] sm:$0xff]
        %v955 = vld [vmem:[#allocation7 + $0x1d0] sm:$0xff]
        %v956 = vld [vmem:[#allocation7 + $0x1d8] sm:$0xff]
        %v957 = vld [vmem:[#allocation7 + $0x1e0] sm:$0xff]
        %v958 = vld [vmem:[#allocation7 + $0x1e8] sm:$0xff]
        %v959 = vld [vmem:[#allocation7 + $0x1f0] sm:$0xff]
        %v960 = vld [vmem:[#allocation7 + $0x1f8] sm:$0xff]
        %v961 = vld [vmem:[#allocation7 + $0x200] sm:$0xff]
        %v962 = vld [vmem:[#allocation7 + $0x208] sm:$0xff]
        %v963 = vld [vmem:[#allocation7 + $0x210] sm:$0xff]
        %v964 = vld [vmem:[#allocation7 + $0x218] sm:$0xff]
        %v965 = vld [vmem:[#allocation7 + $0x220] sm:$0xff]
        %v966 = vld [vmem:[#allocation7 + $0x228] sm:$0xff]
        %v967 = vld [vmem:[#allocation7 + $0x230] sm:$0xff]
        %v968 = vld [vmem:[#allocation7 + $0x238] sm:$0xff]
        %v969 = vld [vmem:[#allocation7 + $0x240] sm:$0xff]
        %v970 = vld [vmem:[#allocation7 + $0x248] sm:$0xff]
        %v971 = vld [vmem:[#allocation7 + $0x250] sm:$0xff]
        %v972 = vld [vmem:[#allocation7 + $0x258] sm:$0xff]
        %v973 = vld [vmem:[#allocation7 + $0x260] sm:$0xff]
        %v974 = vld [vmem:[#allocation7 + $0x268] sm:$0xff]
        %v975 = vld [vmem:[#allocation7 + $0x270] sm:$0xff]
        %v976 = vld [vmem:[#allocation7 + $0x278] sm:$0xff]
        %v977 = vld [vmem:[#allocation7 + $0x280] sm:$0xff]
        %v978 = vld [vmem:[#allocation7 + $0x288] sm:$0xff]
        %v979 = vld [vmem:[#allocation7 + $0x290] sm:$0xff]
        %v980 = vld [vmem:[#allocation7 + $0x298] sm:$0xff]
        %v981 = vld [vmem:[#allocation7 + $0x2a0] sm:$0xff]
        %v982 = vld [vmem:[#allocation7 + $0x2a8] sm:$0xff]
        %v983 = vld [vmem:[#allocation7 + $0x2b0] sm:$0xff]
        %v984 = vld [vmem:[#allocation7 + $0x2b8] sm:$0xff]
        %v985 = vld [vmem:[#allocation7 + $0x2c0] sm:$0xff]
        %v986 = vld [vmem:[#allocation7 + $0x2c8] sm:$0xff]
        %v987 = vld [vmem:[#allocation7 + $0x2d0] sm:$0xff]
        %v988 = vld [vmem:[#allocation7 + $0x2d8] sm:$0xff]
        %v989 = vld [vmem:[#allocation7 + $0x2e0] sm:$0xff]
        %v990 = vld [vmem:[#allocation7 + $0x2e8] sm:$0xff]
        %v991 = vld [vmem:[#allocation7 + $0x2f0] sm:$0xff]
        %v992 = vld [vmem:[#allocation7 + $0x2f8] sm:$0xff]
        %v993 = vld [vmem:[#allocation7 + $0x300] sm:$0xff]
        %v994 = vld [vmem:[#allocation7 + $0x308] sm:$0xff]
        %v995 = vld [vmem:[#allocation7 + $0x310] sm:$0xff]
        %v996 = vld [vmem:[#allocation7 + $0x318] sm:$0xff]
        %v997 = vld [vmem:[#allocation7 + $0x320] sm:$0xff]
        %v998 = vld [vmem:[#allocation7 + $0x328] sm:$0xff]
        %v999 = vld [vmem:[#allocation7 + $0x330] sm:$0xff]
        %v1000 = vld [vmem:[#allocation7 + $0x338] sm:$0xff]
        %v1001 = vld [vmem:[#allocation7 + $0x340] sm:$0xff]
        %v1002 = vld [vmem:[#allocation7 + $0x348] sm:$0xff]
        %v1003 = vld [vmem:[#allocation7 + $0x350] sm:$0xff]
        %v1004 = vld [vmem:[#allocation7 + $0x358] sm:$0xff]
        %v1005 = vld [vmem:[#allocation7 + $0x360] sm:$0xff]
        %v1006 = vld [vmem:[#allocation7 + $0x368] sm:$0xff]
        %v1007 = vld [vmem:[#allocation7 + $0x370] sm:$0xff]
        %v1008 = vld [vmem:[#allocation7 + $0x378] sm:$0xff]
        %v1009 = vld [vmem:[#allocation7 + $0x380] sm:$0xff]
        %v1010 = vld [vmem:[#allocation7 + $0x388] sm:$0xff]
        %v1011 = vld [vmem:[#allocation7 + $0x390] sm:$0xff]
        %v1012 = vld [vmem:[#allocation7 + $0x398] sm:$0xff]
        %v1013 = vld [vmem:[#allocation7 + $0x3a0] sm:$0xff]
        %v1014 = vld [vmem:[#allocation7 + $0x3a8] sm:$0xff]
        %v1015 = vld [vmem:[#allocation7 + $0x3b0] sm:$0xff]
        %v1016 = vld [vmem:[#allocation7 + $0x3b8] sm:$0xff]
        %v1017 = vld [vmem:[#allocation7 + $0x3c0] sm:$0xff]
        %v1018 = vld [vmem:[#allocation7 + $0x3c8] sm:$0xff]
        %v1019 = vld [vmem:[#allocation7 + $0x3d0] sm:$0xff]
        %v1020 = vld [vmem:[#allocation7 + $0x3d8] sm:$0xff]
        %v1021 = vld [vmem:[#allocation7 + $0x3e0] sm:$0xff]
        %v1022 = vld [vmem:[#allocation7 + $0x3e8] sm:$0xff]
        %v1023 = vld [vmem:[#allocation7 + $0x3f0] sm:$0xff]
        %v1024 = vld [vmem:[#allocation7 + $0x3f8] sm:$0xff]
        %v1025 = vld [vmem:[%s8] sm:$0xff]
        %v1027 = vlaneseq
        %v1028 = vshrl.u32 %v1027, 7
        %v1029 = vsub.s32 0, %v1028
        %v1030 = vrot.slane %v1025, %v1029
        %v1031 = vlaneseq
        %v1032 = vshrl.u32 %v1031, 7
        %v1033 = vsub.s32 1, %v1032
        %v1034 = vrot.slane %v1025, %v1033
        %v1035 = vlaneseq
        %v1036 = vshrl.u32 %v1035, 7
        %v1037 = vsub.s32 2, %v1036
        %v1038 = vrot.slane %v1025, %v1037
        %v1039 = vlaneseq
        %v1040 = vshrl.u32 %v1039, 7
        %v1041 = vsub.s32 3, %v1040
        %v1042 = vrot.slane %v1025, %v1041
        %v1043 = vlaneseq
        %v1044 = vshrl.u32 %v1043, 7
        %v1045 = vsub.s32 4, %v1044
        %v1046 = vrot.slane %v1025, %v1045
        %v1047 = vlaneseq
        %v1048 = vshrl.u32 %v1047, 7
        %v1049 = vsub.s32 5, %v1048
        %v1050 = vrot.slane %v1025, %v1049
        %v1051 = vlaneseq
        %v1052 = vshrl.u32 %v1051, 7
        %v1053 = vsub.s32 6, %v1052
        %v1054 = vrot.slane %v1025, %v1053
        %v1055 = vlaneseq
        %v1056 = vshrl.u32 %v1055, 7
        %v1057 = vsub.s32 7, %v1056
        %v1058 = vrot.slane %v1025, %v1057
        %1067 = vmatprep.subr.mxu0 %v898
        %1068 = vmatpush1.msra.mxu0 %v897
        %1069 = vmatprep.subr.mxu0 %v906
        %1070 = vmatpush1.msra.mxu0 %v905
        %1071 = vmatprep.subr.mxu0 %v914
        %1072 = vmatpush1.msra.mxu0 %v913
        %1073 = vmatprep.subr.mxu0 %v922
        %1074 = vmatpush1.msra.mxu0 %v921
        %1075 = vmatprep.subr.mxu0 %v930
        %1076 = vmatpush1.msra.mxu0 %v929
        %1077 = vmatprep.subr.mxu0 %v938
        %1078 = vmatpush1.msra.mxu0 %v937
        %1079 = vmatprep.subr.mxu0 %v946
        %1080 = vmatpush1.msra.mxu0 %v945
        %1081 = vmatprep.subr.mxu0 %v954
        %1082 = vmatpush1.msra.mxu0 %v953
        %1083 = vmatprep.subr.mxu0 %v962
        %1084 = vmatpush1.msra.mxu0 %v961
        %1085 = vmatprep.subr.mxu0 %v970
        %1086 = vmatpush1.msra.mxu0 %v969
        %1087 = vmatprep.subr.mxu0 %v978
        %1088 = vmatpush1.msra.mxu0 %v977
        %1089 = vmatprep.subr.mxu0 %v986
        %1090 = vmatpush1.msra.mxu0 %v985
        %1091 = vmatprep.subr.mxu0 %v994
        %1092 = vmatpush1.msra.mxu0 %v993
        %1093 = vmatprep.subr.mxu0 %v1002
        %1094 = vmatpush1.msra.mxu0 %v1001
        %1095 = vmatprep.subr.mxu0 %v1010
        %1096 = vmatpush1.msra.mxu0 %v1009
        %1097 = vmatprep.subr.mxu0 %v1018
        %1098 = vmatpush1.msra.mxu0 %v1017
        %1099 = vmatprep.subr.mxu0 0.0
        %1100 = vmatpush1.msra.mxu0 0.0
        %1101 = vmatprep.subr.mxu0 0.0
        %1102 = vmatpush1.msra.mxu0 0.0
        %1103 = vmatprep.subr.mxu0 0.0
        %1104 = vmatpush1.msra.mxu0 0.0
        %1105 = vmatprep.subr.mxu0 0.0
        %1106 = vmatpush1.msra.mxu0 0.0
        %1107 = vmatprep.subr.mxu0 0.0
        %1108 = vmatpush1.msra.mxu0 0.0
        %1109 = vmatprep.subr.mxu0 0.0
        %1110 = vmatpush1.msra.mxu0 0.0
        %1111 = vmatprep.subr.mxu0 0.0
        %1112 = vmatpush1.msra.mxu0 0.0
        %1113 = vmatprep.subr.mxu0 0.0
        %1114 = vmatpush1.msra.mxu0 0.0
        %1115 = vmatprep.subr.mxu0 0.0
        %1116 = vmatpush1.msra.mxu0 0.0
        %1117 = vmatprep.subr.mxu0 0.0
        %1118 = vmatpush1.msra.mxu0 0.0
        %1119 = vmatprep.subr.mxu0 0.0
        %1120 = vmatpush1.msra.mxu0 0.0
        %1121 = vmatprep.subr.mxu0 0.0
        %1122 = vmatpush1.msra.mxu0 0.0
        %1123 = vmatprep.subr.mxu0 0.0
        %1124 = vmatpush1.msra.mxu0 0.0
        %1125 = vmatprep.subr.mxu0 0.0
        %1126 = vmatpush1.msra.mxu0 0.0
        %1127 = vmatprep.subr.mxu0 0.0
        %1128 = vmatpush1.msra.mxu0 0.0
        %1129 = vmatprep.subr.mxu0 0.0
        %1130 = vmatpush1.msra.mxu0 0.0
        %1131 = vmatprep.mubr.f32.mxu0 0.0
        %1132 = vmatmul.mubr.f32.gmra.mrb[0].mxu0 %v895
        %v1133 = vpop.f32.mrb[0].mxu0
        %v1134 = vadd.f32 %v1030, %v1133
        %v1135 = vpop.f32.mrb[0].mxu0
        %v1136 = vadd.f32 %v1034, %v1135
        %1137 = vmatprep.mubr.f32.mxu0 0.0
        %1138 = vmatmul.mubr.f32.gmra.mrb[0].mxu0 %v896
        %v1139 = vpop.f32.mrb[0].mxu0
        %v1140 = vadd.f32 %v1030, %v1139
        %v1141 = vpop.f32.mrb[0].mxu0
        %v1142 = vadd.f32 %v1034, %v1141
        %1143 = vdwg.mxu0
        %1144 = vmatprep.subr.mxu0 %v900
        %1145 = vmatpush1.msra.mxu0 %v899
        %1146 = vmatprep.subr.mxu0 %v908
        %1147 = vmatpush1.msra.mxu0 %v907
        %1148 = vmatprep.subr.mxu0 %v916
        %1149 = vmatpush1.msra.mxu0 %v915
        %1150 = vmatprep.subr.mxu0 %v924
        %1151 = vmatpush1.msra.mxu0 %v923
        %1152 = vmatprep.subr.mxu0 %v932
        %1153 = vmatpush1.msra.mxu0 %v931
        %1154 = vmatprep.subr.mxu0 %v940
        %1155 = vmatpush1.msra.mxu0 %v939
        %1156 = vmatprep.subr.mxu0 %v948
        %1157 = vmatpush1.msra.mxu0 %v947
        %1158 = vmatprep.subr.mxu0 %v956
        %1159 = vmatpush1.msra.mxu0 %v955
        %1160 = vmatprep.subr.mxu0 %v964
        %1161 = vmatpush1.msra.mxu0 %v963
        %1162 = vmatprep.subr.mxu0 %v972
        %1163 = vmatpush1.msra.mxu0 %v971
        %1164 = vmatprep.subr.mxu0 %v980
        %1165 = vmatpush1.msra.mxu0 %v979
        %1166 = vmatprep.subr.mxu0 %v988
        %1167 = vmatpush1.msra.mxu0 %v987
        %1168 = vmatprep.subr.mxu0 %v996
        %1169 = vmatpush1.msra.mxu0 %v995
        %1170 = vmatprep.subr.mxu0 %v1004
        %1171 = vmatpush1.msra.mxu0 %v1003
        %1172 = vmatprep.subr.mxu0 %v1012
        %1173 = vmatpush1.msra.mxu0 %v1011
        %1174 = vmatprep.subr.mxu0 %v1020
        %1175 = vmatpush1.msra.mxu0 %v1019
        %1176 = vmatprep.subr.mxu0 0.0
        %1177 = vmatpush1.msra.mxu0 0.0
        %1178 = vmatprep.subr.mxu0 0.0
        %1179 = vmatpush1.msra.mxu0 0.0
        %1180 = vmatprep.subr.mxu0 0.0
        %1181 = vmatpush1.msra.mxu0 0.0
        %1182 = vmatprep.subr.mxu0 0.0
        %1183 = vmatpush1.msra.mxu0 0.0
        %1184 = vmatprep.subr.mxu0 0.0
        %1185 = vmatpush1.msra.mxu0 0.0
        %1186 = vmatprep.subr.mxu0 0.0
        %1187 = vmatpush1.msra.mxu0 0.0
        %1188 = vmatprep.subr.mxu0 0.0
        %1189 = vmatpush1.msra.mxu0 0.0
        %1190 = vmatprep.subr.mxu0 0.0
        %1191 = vmatpush1.msra.mxu0 0.0
        %1192 = vmatprep.subr.mxu0 0.0
        %1193 = vmatpush1.msra.mxu0 0.0
        %1194 = vmatprep.subr.mxu0 0.0
        %1195 = vmatpush1.msra.mxu0 0.0
        %1196 = vmatprep.subr.mxu0 0.0
        %1197 = vmatpush1.msra.mxu0 0.0
        %1198 = vmatprep.subr.mxu0 0.0
        %1199 = vmatpush1.msra.mxu0 0.0
        %1200 = vmatprep.subr.mxu0 0.0
        %1201 = vmatpush1.msra.mxu0 0.0
        %1202 = vmatprep.subr.mxu0 0.0
        %1203 = vmatpush1.msra.mxu0 0.0
        %1204 = vmatprep.subr.mxu0 0.0
        %1205 = vmatpush1.msra.mxu0 0.0
        %1206 = vmatprep.subr.mxu0 0.0
        %1207 = vmatpush1.msra.mxu0 0.0
        %1208 = vmatprep.mubr.f32.mxu0 0.0
        %1209 = vmatmul.mubr.f32.gmra.mrb[0].mxu0 %v895
        %v1210 = vpop.f32.mrb[0].mxu0
        %v1211 = vadd.f32 %v1038, %v1210
        %v1212 = vpop.f32.mrb[0].mxu0
        %v1213 = vadd.f32 %v1042, %v1212
        %1214 = vmatprep.mubr.f32.mxu0 0.0
        %1215 = vmatmul.mubr.f32.gmra.mrb[0].mxu0 %v896
        %v1216 = vpop.f32.mrb[0].mxu0
        %v1217 = vadd.f32 %v1038, %v1216
        %v1218 = vpop.f32.mrb[0].mxu0
        %v1219 = vadd.f32 %v1042, %v1218
        %1220 = vdwg.mxu0
        %1221 = vmatprep.subr.mxu0 %v902
        %1222 = vmatpush1.msra.mxu0 %v901
        %1223 = vmatprep.subr.mxu0 %v910
        %1224 = vmatpush1.msra.mxu0 %v909
        %1225 = vmatprep.subr.mxu0 %v918
        %1226 = vmatpush1.msra.mxu0 %v917
        %1227 = vmatprep.subr.mxu0 %v926
        %1228 = vmatpush1.msra.mxu0 %v925
        %1229 = vmatprep.subr.mxu0 %v934
        %1230 = vmatpush1.msra.mxu0 %v933
        %1231 = vmatprep.subr.mxu0 %v942
        %1232 = vmatpush1.msra.mxu0 %v941
        %1233 = vmatprep.subr.mxu0 %v950
        %1234 = vmatpush1.msra.mxu0 %v949
        %1235 = vmatprep.subr.mxu0 %v958
        %1236 = vmatpush1.msra.mxu0 %v957
        %1237 = vmatprep.subr.mxu0 %v966
        %1238 = vmatpush1.msra.mxu0 %v965
        %1239 = vmatprep.subr.mxu0 %v974
        %1240 = vmatpush1.msra.mxu0 %v973
        %1241 = vmatprep.subr.mxu0 %v982
        %1242 = vmatpush1.msra.mxu0 %v981
        %1243 = vmatprep.subr.mxu0 %v990
        %1244 = vmatpush1.msra.mxu0 %v989
        %1245 = vmatprep.subr.mxu0 %v998
        %1246 = vmatpush1.msra.mxu0 %v997
        %1247 = vmatprep.subr.mxu0 %v1006
        %1248 = vmatpush1.msra.mxu0 %v1005
        %1249 = vmatprep.subr.mxu0 %v1014
        %1250 = vmatpush1.msra.mxu0 %v1013
        %1251 = vmatprep.subr.mxu0 %v1022
        %1252 = vmatpush1.msra.mxu0 %v1021
        %1253 = vmatprep.subr.mxu0 0.0
        %1254 = vmatpush1.msra.mxu0 0.0
        %1255 = vmatprep.subr.mxu0 0.0
        %1256 = vmatpush1.msra.mxu0 0.0
        %1257 = vmatprep.subr.mxu0 0.0
        %1258 = vmatpush1.msra.mxu0 0.0
        %1259 = vmatprep.subr.mxu0 0.0
        %1260 = vmatpush1.msra.mxu0 0.0
        %1261 = vmatprep.subr.mxu0 0.0
        %1262 = vmatpush1.msra.mxu0 0.0
        %1263 = vmatprep.subr.mxu0 0.0
        %1264 = vmatpush1.msra.mxu0 0.0
        %1265 = vmatprep.subr.mxu0 0.0
        %1266 = vmatpush1.msra.mxu0 0.0
        %1267 = vmatprep.subr.mxu0 0.0
        %1268 = vmatpush1.msra.mxu0 0.0
        %1269 = vmatprep.subr.mxu0 0.0
        %1270 = vmatpush1.msra.mxu0 0.0
        %1271 = vmatprep.subr.mxu0 0.0
        %1272 = vmatpush1.msra.mxu0 0.0
        %1273 = vmatprep.subr.mxu0 0.0
        %1274 = vmatpush1.msra.mxu0 0.0
        %1275 = vmatprep.subr.mxu0 0.0
        %1276 = vmatpush1.msra.mxu0 0.0
        %1277 = vmatprep.subr.mxu0 0.0
        %1278 = vmatpush1.msra.mxu0 0.0
        %1279 = vmatprep.subr.mxu0 0.0
        %1280 = vmatpush1.msra.mxu0 0.0
        %1281 = vmatprep.subr.mxu0 0.0
        %1282 = vmatpush1.msra.mxu0 0.0
        %1283 = vmatprep.subr.mxu0 0.0
        %1284 = vmatpush1.msra.mxu0 0.0
        %1285 = vmatprep.mubr.f32.mxu0 0.0
        %1286 = vmatmul.mubr.f32.gmra.mrb[0].mxu0 %v895
        %v1287 = vpop.f32.mrb[0].mxu0
        %v1288 = vadd.f32 %v1046, %v1287
        %v1289 = vpop.f32.mrb[0].mxu0
        %v1290 = vadd.f32 %v1050, %v1289
        %1291 = vmatprep.mubr.f32.mxu0 0.0
        %1292 = vmatmul.mubr.f32.gmra.mrb[0].mxu0 %v896
        %v1293 = vpop.f32.mrb[0].mxu0
        %v1294 = vadd.f32 %v1046, %v1293
        %v1295 = vpop.f32.mrb[0].mxu0
        %v1296 = vadd.f32 %v1050, %v1295
        %1297 = vdwg.mxu0
        %1298 = vmatprep.subr.mxu0 %v904
        %1299 = vmatpush1.msra.mxu0 %v903
        %1300 = vmatprep.subr.mxu0 %v912
        %1301 = vmatpush1.msra.mxu0 %v911
        %1302 = vmatprep.subr.mxu0 %v920
        %1303 = vmatpush1.msra.mxu0 %v919
        %1304 = vmatprep.subr.mxu0 %v928
        %1305 = vmatpush1.msra.mxu0 %v927
        %1306 = vmatprep.subr.mxu0 %v936
        %1307 = vmatpush1.msra.mxu0 %v935
        %1308 = vmatprep.subr.mxu0 %v944
        %1309 = vmatpush1.msra.mxu0 %v943
        %1310 = vmatprep.subr.mxu0 %v952
        %1311 = vmatpush1.msra.mxu0 %v951
        %1312 = vmatprep.subr.mxu0 %v960
        %1313 = vmatpush1.msra.mxu0 %v959
        %1314 = vmatprep.subr.mxu0 %v968
        %1315 = vmatpush1.msra.mxu0 %v967
        %1316 = vmatprep.subr.mxu0 %v976
        %1317 = vmatpush1.msra.mxu0 %v975
        %1318 = vmatprep.subr.mxu0 %v984
        %1319 = vmatpush1.msra.mxu0 %v983
        %1320 = vmatprep.subr.mxu0 %v992
        %1321 = vmatpush1.msra.mxu0 %v991
        %1322 = vmatprep.subr.mxu0 %v1000
        %1323 = vmatpush1.msra.mxu0 %v999
        %1324 = vmatprep.subr.mxu0 %v1008
        %1325 = vmatpush1.msra.mxu0 %v1007
        %1326 = vmatprep.subr.mxu0 %v1016
        %1327 = vmatpush1.msra.mxu0 %v1015
        %1328 = vmatprep.subr.mxu0 %v1024
        %1329 = vmatpush1.msra.mxu0 %v1023
        %1330 = vmatprep.subr.mxu0 0.0
        %1331 = vmatpush1.msra.mxu0 0.0
        %1332 = vmatprep.subr.mxu0 0.0
        %1333 = vmatpush1.msra.mxu0 0.0
        %1334 = vmatprep.subr.mxu0 0.0
        %1335 = vmatpush1.msra.mxu0 0.0
        %1336 = vmatprep.subr.mxu0 0.0
        %1337 = vmatpush1.msra.mxu0 0.0
        %1338 = vmatprep.subr.mxu0 0.0
        %1339 = vmatpush1.msra.mxu0 0.0
        %1340 = vmatprep.subr.mxu0 0.0
        %1341 = vmatpush1.msra.mxu0 0.0
        %1342 = vmatprep.subr.mxu0 0.0
        %1343 = vmatpush1.msra.mxu0 0.0
        %1344 = vmatprep.subr.mxu0 0.0
        %1345 = vmatpush1.msra.mxu0 0.0
        %1346 = vmatprep.subr.mxu0 0.0
        %1347 = vmatpush1.msra.mxu0 0.0
        %1348 = vmatprep.subr.mxu0 0.0
        %1349 = vmatpush1.msra.mxu0 0.0
        %1350 = vmatprep.subr.mxu0 0.0
        %1351 = vmatpush1.msra.mxu0 0.0
        %1352 = vmatprep.subr.mxu0 0.0
        %1353 = vmatpush1.msra.mxu0 0.0
        %1354 = vmatprep.subr.mxu0 0.0
        %1355 = vmatpush1.msra.mxu0 0.0
        %1356 = vmatprep.subr.mxu0 0.0
        %1357 = vmatpush1.msra.mxu0 0.0
        %1358 = vmatprep.subr.mxu0 0.0
        %1359 = vmatpush1.msra.mxu0 0.0
        %1360 = vmatprep.subr.mxu0 0.0
        %1361 = vmatpush1.msra.mxu0 0.0
        %1362 = vmatprep.mubr.f32.mxu0 0.0
        %1363 = vmatmul.mubr.f32.gmra.mrb[0].mxu0 %v895
        %v1364 = vpop.f32.mrb[0].mxu0
        %v1365 = vadd.f32 %v1054, %v1364
        %v1366 = vpop.f32.mrb[0].mxu0
        %v1367 = vadd.f32 %v1058, %v1366
        %1368 = vmatprep.mubr.f32.mxu0 0.0
        %1369 = vmatmul.mubr.f32.gmra.mrb[0].mxu0 %v896
        %v1370 = vpop.f32.mrb[0].mxu0
        %v1371 = vadd.f32 %v1054, %v1370
        %v1372 = vpop.f32.mrb[0].mxu0
        %v1373 = vadd.f32 %v1058, %v1372
        %1374 = vdwg.mxu0
        %v1375 = vmul.f32 %v1288, 0.5
        %v1376 = vmul.f32 %v1290, 0.5
        %v1377 = vmul.f32 %v1365, 0.5
        %v1378 = vmul.f32 %v1367, 0.5
        %v1379 = vmul.f32 %v1294, 0.5
        %v1380 = vmul.f32 %v1296, 0.5
        %v1381 = vmul.f32 %v1371, 0.5
        %v1382 = vmul.f32 %v1373, 0.5
        %v1383 = vmul.f32 %v1375, 1.442695
        %v1384 = vpow.pop %v1383
        %v1385 = vmul.f32 %v1376, 1.442695
        %v1386 = vpow.pop %v1385
        %v1387 = vmul.f32 %v1377, 1.442695
        %v1388 = vpow.pop %v1387
        %v1389 = vmul.f32 %v1378, 1.442695
        %v1390 = vpow.pop %v1389
        %v1391 = vmul.f32 %v1379, 1.442695
        %v1392 = vpow.pop %v1391
        %v1393 = vmul.f32 %v1380, 1.442695
        %v1394 = vpow.pop %v1393
        %v1395 = vmul.f32 %v1381, 1.442695
        %v1396 = vpow.pop %v1395
        %v1397 = vmul.f32 %v1382, 1.442695
        %v1398 = vpow.pop %v1397
        %v1399 = vld [vmem:[%s456] sm:$0xff]
        %v1400 = vld [vmem:[%s456 + $0x8] sm:$0xff]
        %v1401 = vld [vmem:[%s456 + $0x10] sm:$0xff]
        %v1402 = vld [vmem:[%s456 + $0x18] sm:$0xff]
        %v1403 = vld [vmem:[%s456 + $0x20] sm:$0xff]
        %v1404 = vld [vmem:[%s456 + $0x28] sm:$0xff]
        %v1405 = vld [vmem:[%s456 + $0x30] sm:$0xff]
        %v1406 = vld [vmem:[%s456 + $0x38] sm:$0xff]
        %v1407 = vmul.f32 %v1399, %v1384
        %v1408 = vmul.f32 %v1400, %v1386
        %v1409 = vmul.f32 %v1401, %v1388
        %v1410 = vmul.f32 %v1402, %v1390
        %v1411 = vmul.f32 %v1403, %v1392
        %v1412 = vmul.f32 %v1404, %v1394
        %v1413 = vmul.f32 %v1405, %v1396
        %v1414 = vmul.f32 %v1406, %v1398
        %v1415 = vadd.f32 %v1134, %v1407
        %v1416 = vadd.f32 %v1136, %v1408
        %v1417 = vadd.f32 %v1211, %v1409
        %v1418 = vadd.f32 %v1213, %v1410
        %v1419 = vadd.f32 %v1140, %v1411
        %v1420 = vadd.f32 %v1142, %v1412
        %v1421 = vadd.f32 %v1217, %v1413
        %v1422 = vadd.f32 %v1219, %v1414
        %1423 = vst [vmem:[%s498] sm:$0xff] %v1415
        %1424 = vst [vmem:[%s498 + $0x8] sm:$0xff] %v1416
        %1425 = vst [vmem:[%s498 + $0x10] sm:$0xff] %v1417
        %vm1426 = vcmask 130048
        %1427 = vst.msk [vmem:[%s498 + $0x18] sm:$0xff] %vm1426, %v1418
        %1428 = vst [vmem:[%s498 + $0x20] sm:$0xff] %v1419
        %1429 = vst [vmem:[%s498 + $0x28] sm:$0xff] %v1420
        %1430 = vst [vmem:[%s498 + $0x30] sm:$0xff] %v1421
        %1431 = vst.msk [vmem:[%s498 + $0x38] sm:$0xff] %vm1426, %v1422
        %1432 = vst [vmem:[%s505] sm:$0xff] %v1134
        %1433 = vst [vmem:[%s505 + $0x8] sm:$0xff] %v1136
        %1434 = vst [vmem:[%s505 + $0x10] sm:$0xff] %v1211
        %1435 = vst.msk [vmem:[%s505 + $0x18] sm:$0xff] %vm1426, %v1213
        %1436 = vst [vmem:[%s505 + $0x20] sm:$0xff] %v1140
        %1437 = vst [vmem:[%s505 + $0x28] sm:$0xff] %v1142
        %1438 = vst [vmem:[%s505 + $0x30] sm:$0xff] %v1217
        %1439 = vst.msk [vmem:[%s505 + $0x38] sm:$0xff] %vm1426, %v1219
        %1440 = vst [vmem:[%s512] sm:$0xff] %v1288
        %1441 = vst [vmem:[%s512 + $0x8] sm:$0xff] %v1290
        %1442 = vst [vmem:[%s512 + $0x10] sm:$0xff] %v1365
        %1443 = vst.msk [vmem:[%s512 + $0x18] sm:$0xff] %vm1426, %v1367
        %1444 = vst [vmem:[%s512 + $0x20] sm:$0xff] %v1294
        %1445 = vst [vmem:[%s512 + $0x28] sm:$0xff] %v1296
        %1446 = vst [vmem:[%s512 + $0x30] sm:$0xff] %v1371
        %1447 = vst.msk [vmem:[%s512 + $0x38] sm:$0xff] %vm1426, %v1373
        %s1448 = sand.u32 %s263, 1
        %s1449 = scalar_lea.sflag [#allocation4], %s1448
        %s1450 = sand.u32 %s263, 1
        %s1451 = smul.addr %s1450, 64
        %s1452 = scalar_lea.vmem [#allocation10], %s1451
        %s1453 = sand.u32 %s35, 1
        %s1454 = scalar_lea.sflag [#allocation12], %s1453
        %s1455 = sand.u32 %s289, 1
        %s1456 = smul.addr %s1455, 64
        %s1457 = scalar_lea.vmem [#allocation11], %s1456
        %s1458 = sand.u32 %s35, 1
        %s1459 = scalar_lea.sflag [#allocation12], %s1458
        %s1460 = sand.u32 %s315, 1
        %s1461 = smul.addr %s1460, 64
        %s1462 = scalar_lea.vmem [#allocation13], %s1461
        // Predicated region
        $region77: #{hlc_forward.1} parent=59 // pred_check
          %p1463 = pneg %p273
        $region78: #{hlc_forward.1} parent=59 // pred_check_branch
          %1465 = sbr.rel (%p1463) target = $region80
        $region79: #{hlc_forward.1} parent=59 // pred_region
          %s1466 = smul.u32 2, %s35
          %s1468 = ssub.s32 1024, 1024
          %1469 = vsyncadd %s1449, %s1468
          %s1470 = smul.addr %s1466, 4
          %s1471 = smul.addr %s1470, 128
          %s1472 = scalar_lea.hbm %s10, %s1471
          %s1473 = sshll.u32 %s1452, 4
          %s1474 = int_to_ptr.vmem [resolvable:$true] %s1473
          %1479 = dma.vmem_to_hbm [thread:$0]  %s1474, 1024, %s1472, %s1449, 512, 512, 32
        $region80: #{hlc_forward.1} parent=59 // pred_fallthru
          _
        // Predicated region
        $region81: #{hlc_forward.1} parent=59 // pred_check
          %p1480 = pneg %p299
        $region82: #{hlc_forward.1} parent=59 // pred_check_branch
          %1482 = sbr.rel (%p1480) target = $region84
        $region83: #{hlc_forward.1} parent=59 // pred_region
          %s1483 = smul.u32 2, %s35
          %s1485 = ssub.s32 1024, 1024
          %1486 = vsyncadd %s1454, %s1485
          %s1487 = smul.addr %s1483, 4
          %s1488 = smul.addr %s1487, 128
          %s1489 = scalar_lea.hbm %s11, %s1488
          %s1490 = sshll.u32 %s1457, 4
          %s1491 = int_to_ptr.vmem [resolvable:$true] %s1490
          %1496 = dma.vmem_to_hbm [thread:$0]  %s1491, 1024, %s1489, %s1454, 512, 512, 32
        $region84: #{hlc_forward.1} parent=59 // pred_fallthru
          _
        // Predicated region
        $region85: #{hlc_forward.1} parent=59 // pred_check
          %p1497 = pneg %p325
        $region86: #{hlc_forward.1} parent=59 // pred_check_branch
          %1499 = sbr.rel (%p1497) target = $region88
        $region87: #{hlc_forward.1} parent=59 // pred_region
          %s1500 = smul.u32 2, %s35
          %s1502 = ssub.s32 1024, 1024
          %1503 = vsyncadd %s1459, %s1502
          %s1504 = smul.addr %s1500, 4
          %s1505 = smul.addr %s1504, 128
          %s1506 = scalar_lea.hbm %s12, %s1505
          %s1507 = sshll.u32 %s1462, 4
          %s1508 = int_to_ptr.vmem [resolvable:$true] %s1507
          %1513 = dma.vmem_to_hbm [thread:$0]  %s1508, 1024, %s1506, %s1459, 512, 512, 32
        $region88: #{hlc_forward.1} parent=59 // pred_fallthru
          _
      $region60: #{hlc_forward.1} parent=5 // pred_fallthru
        _
      %p1514 = scmp.le.s32.totalorder 2, %s30
      // Predicated region
      $region89: #{hlc_forward.1} parent=5 // pred_check
        %p1515 = pneg %p1514
      $region90: #{hlc_forward.1} parent=5 // pred_check_branch
        %1517 = sbr.rel (%p1515) target = $region92
      $region91: #{hlc_forward.1} parent=5 // pred_region
        %s1518 = ssub.s32 %s30, 2
        // Predicated region
        $region93: #{hlc_forward.1} parent=91 // pred_check
          %p1519 = pneg %p279
        $region94: #{hlc_forward.1} parent=91 // pred_check_branch
          %1521 = sbr.rel (%p1519) target = $region96
        $region95: #{hlc_forward.1} parent=91 // pred_region
          %s1522 = sand.u32 %s264, 1
          %s1523 = scalar_lea.sflag [#allocation4], %s1522
          %s1524 = sand.u32 %s264, 1
          %s1525 = smul.addr %s1524, 64
          %s1526 = scalar_lea.vmem [#allocation10], %s1525
          %1527 = dma.done %s1523, 1024
        $region96: #{hlc_forward.1} parent=91 // pred_fallthru
          _
        // Predicated region
        $region97: #{hlc_forward.1} parent=91 // pred_check
          %p1528 = pneg %p305
        $region98: #{hlc_forward.1} parent=91 // pred_check_branch
          %1530 = sbr.rel (%p1528) target = $region100
        $region99: #{hlc_forward.1} parent=91 // pred_region
          %s1531 = sand.u32 %s36, 1
          %s1532 = scalar_lea.sflag [#allocation12], %s1531
          %s1533 = sand.u32 %s290, 1
          %s1534 = smul.addr %s1533, 64
          %s1535 = scalar_lea.vmem [#allocation11], %s1534
          %1536 = dma.done %s1532, 1024
        $region100: #{hlc_forward.1} parent=91 // pred_fallthru
          _
        // Predicated region
        $region101: #{hlc_forward.1} parent=91 // pred_check
          %p1537 = pneg %p331
        $region102: #{hlc_forward.1} parent=91 // pred_check_branch
          %1539 = sbr.rel (%p1537) target = $region104
        $region103: #{hlc_forward.1} parent=91 // pred_region
          %s1540 = sand.u32 %s36, 1
          %s1541 = scalar_lea.sflag [#allocation12], %s1540
          %s1542 = sand.u32 %s316, 1
          %s1543 = smul.addr %s1542, 64
          %s1544 = scalar_lea.vmem [#allocation13], %s1543
          %1545 = dma.done %s1541, 1024
        $region104: #{hlc_forward.1} parent=91 // pred_fallthru
          _
      $region92: #{hlc_forward.1} parent=5 // pred_fallthru
        _
    $region6: #{hlc_forward.1} parent=1 // loop_footer
      %s34 = sadd.s32 1, %s30
    $region7: #{hlc_forward.1} parent=1 // loop_footer_branch
      %29 = sbr.rel target = $region3
    $region8: #{hlc_forward.1} parent=1 // loop_exit
      _
    %1546 = vsyncpa [#allocation3], 1
    %s1547 = scalar_lea.sflag [#allocation3], 1
    %1548 = vsyncpa %s1547, 1
    %1549 = vsyncpa [#allocation6], 1
    %1550 = vsyncpa [#allocation9], 1
    %s1551 = scalar_lea.sflag [#allocation9], 1
    %1552 = vsyncpa %s1551, 1
    %1553 = vsyncpa [#allocation4], 1
    %s1554 = scalar_lea.sflag [#allocation4], 1
    %1555 = vsyncpa %s1554, 1
    %1556 = vsyncpa [#allocation12], 1
    %s1557 = scalar_lea.sflag [#allocation12], 1
    %1558 = vsyncpa %s1557, 1

</llo_original>
